<compile_context>
chip_gen: v5e
topology: v5e:2x2
jax: 0.10.0
libtpu: 0.0.40
codegen_flags: <defaults>
</compile_context>

<pallas_src>
import functools

import jax
import jax.numpy as jnp
from jax import lax
from jax.experimental import pallas as pl
from jax.experimental.pallas import tpu as pltpu


# ------------------------------ Pallas kernel --------------------------------
def _fused_subsampling_kernel(p1_ref, w1_ref, b1_ref, w2_ref, b2_ref, o_ref,
                              *, T2, F2, E):
    """One batch element: conv1+ReLU -> conv2+ReLU -> permute, all in VMEM.

    p1_ref : (1, 4, Tph*Fph, 9)  conv1 im2col patches, pre-split into the four
                                 stride-2 output phases of h1 (Tph=T2+1, Fph=F2+1)
    w1_ref : (9, E)              conv1 weight, (kh*kw*Cin) x E
    b1_ref : (1, E)
    w2_ref : (9, E, E)           conv2 weight per 3x3 tap: (E_in, E_out)
    b2_ref : (1, E)
    o_ref  : (1, T2, E*F2)       final PyTorch layout (permute folded in)
    """
    Tph, Fph = T2 + 1, F2 + 1
    w1 = w1_ref[...]
    b1 = b1_ref[...]
    b2 = b2_ref[...]

    # conv1 (+bias+ReLU): one small MXU matmul per h1 phase; h1 stays in VMEM.
    h1_phase = []
    for ph in range(4):
        h = jnp.dot(p1_ref[0, ph], w1, preferred_element_type=jnp.float32)
        h = jnp.maximum(h + b1, 0.0)
        h1_phase.append(h.reshape(Tph, Fph, E))

    # conv2: 9 accumulating MXU matmuls over the 3x3 taps.  Tap (a, c) reads
    # h1[2*t2 + a, 2*f2 + c, :], which in phase layout is a static, unstrided
    # slice of phase (a % 2, c % 2).
    acc = jnp.zeros((T2 * F2, E), jnp.float32)
    for a in range(3):
        for c in range(3):
            ph = (a % 2) * 2 + (c % 2)
            tap = h1_phase[ph][a // 2:a // 2 + T2, c // 2:c // 2 + F2, :]
            acc = acc + jnp.dot(tap.reshape(T2 * F2, E), w2_ref[3 * a + c],
                                preferred_element_type=jnp.float32)
    h2 = jnp.maximum(acc + b2, 0.0).reshape(T2, F2, E)

    # Fold permute(0,2,1,3)+view into the store: (T2, F2, E) -> (T2, E*F2).
    o_ref[0] = jnp.transpose(h2, (0, 2, 1)).reshape(T2, E * F2).astype(o_ref.dtype)


# --------------------------------- wrapper ------------------------------------
def conv2d_subsampling_forward(x, params):
    """x: (B, T, F) float32 -> (B, T2, E * F2), matching the PyTorch module."""
    B, T, F = x.shape
    E = params["b1"].shape[0]
    T1, F1 = (T - 3) // 2 + 1, (F - 3) // 2 + 1
    T2, F2 = (T1 - 3) // 2 + 1, (F1 - 3) // 2 + 1
    Tph, Fph = T2 + 1, F2 + 1            # phase extents (+1 halo row/col for tap offset 1)
    Mph = Tph * Fph

    # conv1 im2col on the raw 1-channel input, pre-split into the 4 stride-2
    # phases of h1:  p1[b, 2*pi+pj, t*Fph+f, 3*a+c] = x[b, 4t+2pi+a, 4f+2pj+c].
    # Zero padding only lands in halo entries that conv2 never reads.
    Tpad, Fpad = 4 * Tph + 1, 4 * Fph + 1
    xp = jnp.pad(x, ((0, 0), (0, max(0, Tpad - T)), (0, max(0, Fpad - F))))
    phases = []
    for pi in range(2):
        for pj in range(2):
            taps = []
            for a in range(3):
                for c in range(3):
                    s0, s1 = 2 * pi + a, 2 * pj + c
                    taps.append(xp[:, s0:s0 + 4 * Tph:4, s1:s1 + 4 * Fph:4])
            phases.append(jnp.stack(taps, axis=-1))            # (B, Tph, Fph, 9)
    p1 = jnp.stack(phases, axis=1).reshape(B, 4, Mph, 9)

    w2 = params["w2"].reshape(9, E, E)
    b1 = params["b1"].reshape(1, E)
    b2 = params["b2"].reshape(1, E)

    # Explicit scoped-VMEM hint: 2x-buffered input/output tiles + resident
    # weights + intermediates, with headroom for (8, 128) layout padding.
    pad8 = lambda v: -(-v // 8) * 8
    pad128 = lambda v: -(-v // 128) * 128
    est = 4 * (2 * 4 * pad8(Mph) * 128                  # p1 tile (lane dim 9 -> 128)
               + 2 * pad8(T2) * pad128(E * F2)          # output tile
               + pad8(9) * pad128(E) + 9 * pad8(E) * pad128(E) + 2 * pad128(E)
               + 12 * pad8(Tph * Fph) * pad128(E))      # h1 phases / acc / temps
    vmem_limit = int(min(64 * 1024 * 1024, max(16 * 1024 * 1024, 2 * est)))

    kernel = functools.partial(_fused_subsampling_kernel, T2=T2, F2=F2, E=E)
    return pl.pallas_call(
        kernel,
        out_shape=jax.ShapeDtypeStruct((B, T2, E * F2), x.dtype),
        grid=(B,),
        in_specs=[
            pl.BlockSpec((1, 4, Mph, 9), lambda b: (b, 0, 0, 0)),
            pl.BlockSpec((9, E), lambda b: (0, 0)),        # grid-invariant: DMA'd once
            pl.BlockSpec((1, E), lambda b: (0, 0)),
            pl.BlockSpec((9, E, E), lambda b: (0, 0, 0)),
            pl.BlockSpec((1, E), lambda b: (0, 0)),
        ],
        out_specs=pl.BlockSpec((1, T2, E * F2), lambda b: (b, 0, 0)),
        compiler_params=pltpu.CompilerParams(
            dimension_semantics=("parallel",),
            vmem_limit_bytes=vmem_limit),
    )(p1, params["w1"], b1, w2, b2)


# ----------------------------- reference (pure JAX) ---------------------------
def _reference_forward(x, params):
    """lax.conv reference used to validate the Pallas path."""
    E = params["b1"].shape[0]
    w1 = params["w1"].reshape(3, 3, 1, E)                # HWIO
    w2 = params["w2"].reshape(3, 3, E, E)                # HWIO
    dn = ("NHWC", "HWIO", "NHWC")
    h = x[..., None]
    h = lax.conv_general_dilated(h, w1, (2, 2), "VALID", dimension_numbers=dn)
    h = jnp.maximum(h + params["b1"], 0.0)
    h = lax.conv_general_dilated(h, w2, (2, 2), "VALID", dimension_numbers=dn)
    h = jnp.maximum(h + params["b2"], 0.0)               # (B, T2, F2, E)
    B, T2, F2, _ = h.shape
    return jnp.transpose(h, (0, 1, 3, 2)).reshape(B, T2, E * F2)


# ------------------------------------ main ------------------------------------
if __name__ == "__main__":
    B, T, F, E = 2, 16, 16, 16   # small (batch, time, d_input, embed_dim)

    key = jax.random.PRNGKey(0)
    k_x, k_w1, k_b1, k_w2, k_b2 = jax.random.split(key, 5)

    # Weights stored flattened in im2col order (kh, kw, Cin) x Cout.
    params = {
        "w1": jax.random.normal(k_w1, (9 * 1, E), jnp.float32) * 0.1,
        "b1": jax.random.normal(k_b1, (E,), jnp.float32) * 0.1,
        "w2": jax.random.normal(k_w2, (9 * E, E), jnp.float32) * 0.05,
        "b2": jax.random.normal(k_b2, (E,), jnp.float32) * 0.1,
    }
    x = jax.random.normal(k_x, (B, T, F), jnp.float32)

    fwd = jax.jit(conv2d_subsampling_forward)
    out = jax.block_until_ready(fwd(x, params))

    # shape check: T1 = F1 = 7, T2 = F2 = 3 -> (B, 3, E*3)
    assert out.shape == (B, 3, E * 3), out.shape

    ref = jax.block_until_ready(_reference_forward(x, params))
    assert jnp.allclose(out, ref, atol=1e-4, rtol=1e-4), \
        float(jnp.max(jnp.abs(out - ref)))

    print("KERNEL_OK")
</pallas_src>

<mosaic_0001>
module attributes {stable_mosaic.version = 11 : i64} {
  func.func @_fused_subsampling_kernel(%arg0: i32, %arg1: memref<1x4x16x9xf32, #tpu.memory_space<vmem>>, %arg2: memref<9x16xf32, #tpu.memory_space<vmem>>, %arg3: memref<1x16xf32, #tpu.memory_space<vmem>>, %arg4: memref<9x16x16xf32, #tpu.memory_space<vmem>>, %arg5: memref<1x16xf32, #tpu.memory_space<vmem>>, %arg6: memref<1x3x48xf32, #tpu.memory_space<vmem>>) attributes {dimension_semantics = [#tpu.dimension_semantics<parallel>], iteration_bounds = array<i64: 2>, scalar_prefetch = 0 : i64, scratch_operands = 0 : i64, tpu.core_type = #tpu.core_type<tc>, window_params = [{transform_indices = @transform_0, window_bounds = array<i64: 1, 4, 16, 9>}, {pipeline_mode = #tpu.pipeline_mode<synchronous>, transform_indices = @transform_1, window_bounds = array<i64: 9, 16>}, {pipeline_mode = #tpu.pipeline_mode<synchronous>, transform_indices = @transform_2, window_bounds = array<i64: 1, 16>}, {pipeline_mode = #tpu.pipeline_mode<synchronous>, transform_indices = @transform_3, window_bounds = array<i64: 9, 16, 16>}, {pipeline_mode = #tpu.pipeline_mode<synchronous>, transform_indices = @transform_4, window_bounds = array<i64: 1, 16>}, {transform_indices = @transform_5, window_bounds = array<i64: 1, 3, 48>}]} {
    %c0 = arith.constant 0 : index
    %c0_0 = arith.constant 0 : index
    %0 = vector.load %arg2[%c0, %c0_0] : memref<9x16xf32, #tpu.memory_space<vmem>>, vector<9x16xf32>
    %c0_1 = arith.constant 0 : index
    %c0_2 = arith.constant 0 : index
    %1 = vector.load %arg3[%c0_1, %c0_2] : memref<1x16xf32, #tpu.memory_space<vmem>>, vector<1x16xf32>
    %c0_3 = arith.constant 0 : index
    %c0_4 = arith.constant 0 : index
    %2 = vector.load %arg5[%c0_3, %c0_4] : memref<1x16xf32, #tpu.memory_space<vmem>>, vector<1x16xf32>
    %c0_5 = arith.constant 0 : index
    %c0_6 = arith.constant 0 : index
    %c0_7 = arith.constant 0 : index
    %c0_8 = arith.constant 0 : index
    %3 = vector.load %arg1[%c0_5, %c0_6, %c0_7, %c0_8] : memref<1x4x16x9xf32, #tpu.memory_space<vmem>>, vector<1x1x16x9xf32>
    %4 = vector.shape_cast %3 : vector<1x1x16x9xf32> to vector<16x9xf32>
    %cst = arith.constant dense<0.000000e+00> : vector<16x16xf32>
    %5 = tpu.matmul %4, %0, %cst {dimension_numbers = #tpu.dot_dimension_numbers<[1], [0], [0], [1], [0, 0, 1, 1], [], []>} : vector<16x9xf32>, vector<9x16xf32>, vector<16x16xf32> -> vector<16x16xf32>
    %6 = vector.broadcast %1 : vector<1x16xf32> to vector<16x16xf32>
    %7 = arith.addf %5, %6 : vector<16x16xf32>
    %cst_9 = arith.constant 0.000000e+00 : f32
    %8 = vector.broadcast %cst_9 : f32 to vector<16x16xf32>
    %9 = arith.maximumf %7, %8 : vector<16x16xf32>
    %10 = vector.shape_cast %9 : vector<16x16xf32> to vector<4x4x16xf32>
    %c0_10 = arith.constant 0 : index
    %c1 = arith.constant 1 : index
    %c0_11 = arith.constant 0 : index
    %c0_12 = arith.constant 0 : index
    %11 = vector.load %arg1[%c0_10, %c1, %c0_11, %c0_12] : memref<1x4x16x9xf32, #tpu.memory_space<vmem>>, vector<1x1x16x9xf32>
    %12 = vector.shape_cast %11 : vector<1x1x16x9xf32> to vector<16x9xf32>
    %cst_13 = arith.constant dense<0.000000e+00> : vector<16x16xf32>
    %13 = tpu.matmul %12, %0, %cst_13 {dimension_numbers = #tpu.dot_dimension_numbers<[1], [0], [0], [1], [0, 0, 1, 1], [], []>} : vector<16x9xf32>, vector<9x16xf32>, vector<16x16xf32> -> vector<16x16xf32>
    %14 = vector.broadcast %1 : vector<1x16xf32> to vector<16x16xf32>
    %15 = arith.addf %13, %14 : vector<16x16xf32>
    %cst_14 = arith.constant 0.000000e+00 : f32
    %16 = vector.broadcast %cst_14 : f32 to vector<16x16xf32>
    %17 = arith.maximumf %15, %16 : vector<16x16xf32>
    %18 = vector.shape_cast %17 : vector<16x16xf32> to vector<4x4x16xf32>
    %c0_15 = arith.constant 0 : index
    %c2 = arith.constant 2 : index
    %c0_16 = arith.constant 0 : index
    %c0_17 = arith.constant 0 : index
    %19 = vector.load %arg1[%c0_15, %c2, %c0_16, %c0_17] : memref<1x4x16x9xf32, #tpu.memory_space<vmem>>, vector<1x1x16x9xf32>
    %20 = vector.shape_cast %19 : vector<1x1x16x9xf32> to vector<16x9xf32>
    %cst_18 = arith.constant dense<0.000000e+00> : vector<16x16xf32>
    %21 = tpu.matmul %20, %0, %cst_18 {dimension_numbers = #tpu.dot_dimension_numbers<[1], [0], [0], [1], [0, 0, 1, 1], [], []>} : vector<16x9xf32>, vector<9x16xf32>, vector<16x16xf32> -> vector<16x16xf32>
    %22 = vector.broadcast %1 : vector<1x16xf32> to vector<16x16xf32>
    %23 = arith.addf %21, %22 : vector<16x16xf32>
    %cst_19 = arith.constant 0.000000e+00 : f32
    %24 = vector.broadcast %cst_19 : f32 to vector<16x16xf32>
    %25 = arith.maximumf %23, %24 : vector<16x16xf32>
    %26 = vector.shape_cast %25 : vector<16x16xf32> to vector<4x4x16xf32>
    %c0_20 = arith.constant 0 : index
    %c3 = arith.constant 3 : index
    %c0_21 = arith.constant 0 : index
    %c0_22 = arith.constant 0 : index
    %27 = vector.load %arg1[%c0_20, %c3, %c0_21, %c0_22] : memref<1x4x16x9xf32, #tpu.memory_space<vmem>>, vector<1x1x16x9xf32>
    %28 = vector.shape_cast %27 : vector<1x1x16x9xf32> to vector<16x9xf32>
    %cst_23 = arith.constant dense<0.000000e+00> : vector<16x16xf32>
    %29 = tpu.matmul %28, %0, %cst_23 {dimension_numbers = #tpu.dot_dimension_numbers<[1], [0], [0], [1], [0, 0, 1, 1], [], []>} : vector<16x9xf32>, vector<9x16xf32>, vector<16x16xf32> -> vector<16x16xf32>
    %30 = vector.broadcast %1 : vector<1x16xf32> to vector<16x16xf32>
    %31 = arith.addf %29, %30 : vector<16x16xf32>
    %cst_24 = arith.constant 0.000000e+00 : f32
    %32 = vector.broadcast %cst_24 : f32 to vector<16x16xf32>
    %33 = arith.maximumf %31, %32 : vector<16x16xf32>
    %34 = vector.shape_cast %33 : vector<16x16xf32> to vector<4x4x16xf32>
    %cst_25 = arith.constant 0.000000e+00 : f32
    %35 = vector.broadcast %cst_25 : f32 to vector<9x16xf32>
    %36 = vector.extract_strided_slice %10 {offsets = [0, 0, 0], sizes = [3, 3, 16], strides = [1, 1, 1]} : vector<4x4x16xf32> to vector<3x3x16xf32>
    %37 = vector.shape_cast %36 : vector<3x3x16xf32> to vector<9x16xf32>
    %c0_26 = arith.constant 0 : index
    %c0_27 = arith.constant 0 : index
    %c0_28 = arith.constant 0 : index
    %38 = vector.load %arg4[%c0_26, %c0_27, %c0_28] : memref<9x16x16xf32, #tpu.memory_space<vmem>>, vector<1x16x16xf32>
    %39 = vector.shape_cast %38 : vector<1x16x16xf32> to vector<16x16xf32>
    %cst_29 = arith.constant dense<0.000000e+00> : vector<9x16xf32>
    %40 = tpu.matmul %37, %39, %cst_29 {dimension_numbers = #tpu.dot_dimension_numbers<[1], [0], [0], [1], [0, 0, 1, 1], [], []>} : vector<9x16xf32>, vector<16x16xf32>, vector<9x16xf32> -> vector<9x16xf32>
    %41 = arith.addf %35, %40 : vector<9x16xf32>
    %42 = vector.extract_strided_slice %18 {offsets = [0, 0, 0], sizes = [3, 3, 16], strides = [1, 1, 1]} : vector<4x4x16xf32> to vector<3x3x16xf32>
    %43 = vector.shape_cast %42 : vector<3x3x16xf32> to vector<9x16xf32>
    %c1_30 = arith.constant 1 : index
    %c0_31 = arith.constant 0 : index
    %c0_32 = arith.constant 0 : index
    %44 = vector.load %arg4[%c1_30, %c0_31, %c0_32] : memref<9x16x16xf32, #tpu.memory_space<vmem>>, vector<1x16x16xf32>
    %45 = vector.shape_cast %44 : vector<1x16x16xf32> to vector<16x16xf32>
    %cst_33 = arith.constant dense<0.000000e+00> : vector<9x16xf32>
    %46 = tpu.matmul %43, %45, %cst_33 {dimension_numbers = #tpu.dot_dimension_numbers<[1], [0], [0], [1], [0, 0, 1, 1], [], []>} : vector<9x16xf32>, vector<16x16xf32>, vector<9x16xf32> -> vector<9x16xf32>
    %47 = arith.addf %41, %46 : vector<9x16xf32>
    %48 = vector.extract_strided_slice %10 {offsets = [0, 1, 0], sizes = [3, 3, 16], strides = [1, 1, 1]} : vector<4x4x16xf32> to vector<3x3x16xf32>
    %49 = vector.shape_cast %48 : vector<3x3x16xf32> to vector<9x16xf32>
    %c2_34 = arith.constant 2 : index
    %c0_35 = arith.constant 0 : index
    %c0_36 = arith.constant 0 : index
    %50 = vector.load %arg4[%c2_34, %c0_35, %c0_36] : memref<9x16x16xf32, #tpu.memory_space<vmem>>, vector<1x16x16xf32>
    %51 = vector.shape_cast %50 : vector<1x16x16xf32> to vector<16x16xf32>
    %cst_37 = arith.constant dense<0.000000e+00> : vector<9x16xf32>
    %52 = tpu.matmul %49, %51, %cst_37 {dimension_numbers = #tpu.dot_dimension_numbers<[1], [0], [0], [1], [0, 0, 1, 1], [], []>} : vector<9x16xf32>, vector<16x16xf32>, vector<9x16xf32> -> vector<9x16xf32>
    %53 = arith.addf %47, %52 : vector<9x16xf32>
    %54 = vector.extract_strided_slice %26 {offsets = [0, 0, 0], sizes = [3, 3, 16], strides = [1, 1, 1]} : vector<4x4x16xf32> to vector<3x3x16xf32>
    %55 = vector.shape_cast %54 : vector<3x3x16xf32> to vector<9x16xf32>
    %c3_38 = arith.constant 3 : index
    %c0_39 = arith.constant 0 : index
    %c0_40 = arith.constant 0 : index
    %56 = vector.load %arg4[%c3_38, %c0_39, %c0_40] : memref<9x16x16xf32, #tpu.memory_space<vmem>>, vector<1x16x16xf32>
    %57 = vector.shape_cast %56 : vector<1x16x16xf32> to vector<16x16xf32>
    %cst_41 = arith.constant dense<0.000000e+00> : vector<9x16xf32>
    %58 = tpu.matmul %55, %57, %cst_41 {dimension_numbers = #tpu.dot_dimension_numbers<[1], [0], [0], [1], [0, 0, 1, 1], [], []>} : vector<9x16xf32>, vector<16x16xf32>, vector<9x16xf32> -> vector<9x16xf32>
    %59 = arith.addf %53, %58 : vector<9x16xf32>
    %60 = vector.extract_strided_slice %34 {offsets = [0, 0, 0], sizes = [3, 3, 16], strides = [1, 1, 1]} : vector<4x4x16xf32> to vector<3x3x16xf32>
    %61 = vector.shape_cast %60 : vector<3x3x16xf32> to vector<9x16xf32>
    %c4 = arith.constant 4 : index
    %c0_42 = arith.constant 0 : index
    %c0_43 = arith.constant 0 : index
    %62 = vector.load %arg4[%c4, %c0_42, %c0_43] : memref<9x16x16xf32, #tpu.memory_space<vmem>>, vector<1x16x16xf32>
    %63 = vector.shape_cast %62 : vector<1x16x16xf32> to vector<16x16xf32>
    %cst_44 = arith.constant dense<0.000000e+00> : vector<9x16xf32>
    %64 = tpu.matmul %61, %63, %cst_44 {dimension_numbers = #tpu.dot_dimension_numbers<[1], [0], [0], [1], [0, 0, 1, 1], [], []>} : vector<9x16xf32>, vector<16x16xf32>, vector<9x16xf32> -> vector<9x16xf32>
    %65 = arith.addf %59, %64 : vector<9x16xf32>
    %66 = vector.extract_strided_slice %26 {offsets = [0, 1, 0], sizes = [3, 3, 16], strides = [1, 1, 1]} : vector<4x4x16xf32> to vector<3x3x16xf32>
    %67 = vector.shape_cast %66 : vector<3x3x16xf32> to vector<9x16xf32>
    %c5 = arith.constant 5 : index
    %c0_45 = arith.constant 0 : index
    %c0_46 = arith.constant 0 : index
    %68 = vector.load %arg4[%c5, %c0_45, %c0_46] : memref<9x16x16xf32, #tpu.memory_space<vmem>>, vector<1x16x16xf32>
    %69 = vector.shape_cast %68 : vector<1x16x16xf32> to vector<16x16xf32>
    %cst_47 = arith.constant dense<0.000000e+00> : vector<9x16xf32>
    %70 = tpu.matmul %67, %69, %cst_47 {dimension_numbers = #tpu.dot_dimension_numbers<[1], [0], [0], [1], [0, 0, 1, 1], [], []>} : vector<9x16xf32>, vector<16x16xf32>, vector<9x16xf32> -> vector<9x16xf32>
    %71 = arith.addf %65, %70 : vector<9x16xf32>
    %72 = vector.extract_strided_slice %10 {offsets = [1, 0, 0], sizes = [3, 3, 16], strides = [1, 1, 1]} : vector<4x4x16xf32> to vector<3x3x16xf32>
    %73 = vector.shape_cast %72 : vector<3x3x16xf32> to vector<9x16xf32>
    %c6 = arith.constant 6 : index
    %c0_48 = arith.constant 0 : index
    %c0_49 = arith.constant 0 : index
    %74 = vector.load %arg4[%c6, %c0_48, %c0_49] : memref<9x16x16xf32, #tpu.memory_space<vmem>>, vector<1x16x16xf32>
    %75 = vector.shape_cast %74 : vector<1x16x16xf32> to vector<16x16xf32>
    %cst_50 = arith.constant dense<0.000000e+00> : vector<9x16xf32>
    %76 = tpu.matmul %73, %75, %cst_50 {dimension_numbers = #tpu.dot_dimension_numbers<[1], [0], [0], [1], [0, 0, 1, 1], [], []>} : vector<9x16xf32>, vector<16x16xf32>, vector<9x16xf32> -> vector<9x16xf32>
    %77 = arith.addf %71, %76 : vector<9x16xf32>
    %78 = vector.extract_strided_slice %18 {offsets = [1, 0, 0], sizes = [3, 3, 16], strides = [1, 1, 1]} : vector<4x4x16xf32> to vector<3x3x16xf32>
    %79 = vector.shape_cast %78 : vector<3x3x16xf32> to vector<9x16xf32>
    %c7 = arith.constant 7 : index
    %c0_51 = arith.constant 0 : index
    %c0_52 = arith.constant 0 : index
    %80 = vector.load %arg4[%c7, %c0_51, %c0_52] : memref<9x16x16xf32, #tpu.memory_space<vmem>>, vector<1x16x16xf32>
    %81 = vector.shape_cast %80 : vector<1x16x16xf32> to vector<16x16xf32>
    %cst_53 = arith.constant dense<0.000000e+00> : vector<9x16xf32>
    %82 = tpu.matmul %79, %81, %cst_53 {dimension_numbers = #tpu.dot_dimension_numbers<[1], [0], [0], [1], [0, 0, 1, 1], [], []>} : vector<9x16xf32>, vector<16x16xf32>, vector<9x16xf32> -> vector<9x16xf32>
    %83 = arith.addf %77, %82 : vector<9x16xf32>
    %84 = vector.extract_strided_slice %10 {offsets = [1, 1, 0], sizes = [3, 3, 16], strides = [1, 1, 1]} : vector<4x4x16xf32> to vector<3x3x16xf32>
    %85 = vector.shape_cast %84 : vector<3x3x16xf32> to vector<9x16xf32>
    %c8 = arith.constant 8 : index
    %c0_54 = arith.constant 0 : index
    %c0_55 = arith.constant 0 : index
    %86 = vector.load %arg4[%c8, %c0_54, %c0_55] : memref<9x16x16xf32, #tpu.memory_space<vmem>>, vector<1x16x16xf32>
    %87 = vector.shape_cast %86 : vector<1x16x16xf32> to vector<16x16xf32>
    %cst_56 = arith.constant dense<0.000000e+00> : vector<9x16xf32>
    %88 = tpu.matmul %85, %87, %cst_56 {dimension_numbers = #tpu.dot_dimension_numbers<[1], [0], [0], [1], [0, 0, 1, 1], [], []>} : vector<9x16xf32>, vector<16x16xf32>, vector<9x16xf32> -> vector<9x16xf32>
    %89 = arith.addf %83, %88 : vector<9x16xf32>
    %90 = vector.broadcast %2 : vector<1x16xf32> to vector<9x16xf32>
    %91 = arith.addf %89, %90 : vector<9x16xf32>
    %cst_57 = arith.constant 0.000000e+00 : f32
    %92 = vector.broadcast %cst_57 : f32 to vector<9x16xf32>
    %93 = arith.maximumf %91, %92 : vector<9x16xf32>
    %94 = vector.shape_cast %93 : vector<9x16xf32> to vector<3x3x16xf32>
    %95 = tpu.transpose %94, [0, 2, 1] : vector<3x3x16xf32> -> vector<3x16x3xf32>
    %96 = vector.shape_cast %95 : vector<3x16x3xf32> to vector<3x48xf32>
    %c0_58 = arith.constant 0 : index
    %c0_59 = arith.constant 0 : index
    %c0_60 = arith.constant 0 : index
    %97 = vector.load %arg6[%c0_58, %c0_59, %c0_60] : memref<1x3x48xf32, #tpu.memory_space<vmem>>, vector<1x3x48xf32>
    %98 = vector.shape_cast %97 : vector<1x3x48xf32> to vector<3x48xf32>
    %99 = vector.shape_cast %96 : vector<3x48xf32> to vector<1x3x48xf32>
    tpu.vector_store %arg6[%c0_58, %c0_59, %c0_60], %99 {strides = array<i32>} : memref<1x3x48xf32, #tpu.memory_space<vmem>>, vector<1x3x48xf32>,
    return
  }
  func.func @transform_0(%arg0: i32) -> (i32, i32, i32, i32) {
    %c0_i32 = arith.constant 0 : i32
    %c0_i32_0 = arith.constant 0 : i32
    %c0_i32_1 = arith.constant 0 : i32
    %c0_i32_2 = arith.constant 0 : i32
    return %arg0, %c0_i32, %c0_i32_0, %c0_i32_1 : i32, i32, i32, i32
  }
  func.func @transform_1(%arg0: i32) -> (i32, i32) {
    %c0_i32 = arith.constant 0 : i32
    %c0_i32_0 = arith.constant 0 : i32
    %c0_i32_1 = arith.constant 0 : i32
    return %c0_i32, %c0_i32_0 : i32, i32
  }
  func.func @transform_2(%arg0: i32) -> (i32, i32) {
    %c0_i32 = arith.constant 0 : i32
    %c0_i32_0 = arith.constant 0 : i32
    %c0_i32_1 = arith.constant 0 : i32
    return %c0_i32, %c0_i32_0 : i32, i32
  }
  func.func @transform_3(%arg0: i32) -> (i32, i32, i32) {
    %c0_i32 = arith.constant 0 : i32
    %c0_i32_0 = arith.constant 0 : i32
    %c0_i32_1 = arith.constant 0 : i32
    %c0_i32_2 = arith.constant 0 : i32
    return %c0_i32, %c0_i32_0, %c0_i32_1 : i32, i32, i32
  }
  func.func @transform_4(%arg0: i32) -> (i32, i32) {
    %c0_i32 = arith.constant 0 : i32
    %c0_i32_0 = arith.constant 0 : i32
    %c0_i32_1 = arith.constant 0 : i32
    return %c0_i32, %c0_i32_0 : i32, i32
  }
  func.func @transform_5(%arg0: i32) -> (i32, i32, i32) {
    %c0_i32 = arith.constant 0 : i32
    %c0_i32_0 = arith.constant 0 : i32
    %c0_i32_1 = arith.constant 0 : i32
    return %arg0, %c0_i32, %c0_i32_0 : i32, i32, i32
  }
}

</mosaic_0001>

<llo_original>
// kernel: conv2d_subsampling_forward.1
$region0: #{conv2d_subsampling_forward.1}
  #allocation0 [shape = 'u32[]', space=smem, size = 0x4, offset = 0x4, fixed_abs, tag = 'smem constant byte address 0x4 - core index']
  #allocation1 [shape = 'u32[72,128]{1,0:T(1,128)}', space=vmem, size = 0x9000, scoped, tag = 'internal scratch']
  %s0 = inlined_call_operand.vmem [shape: f32[2,4,16,9], index: 0, kind: input, shape index: {}]
  %s1 = inlined_call_operand.vmem [shape: f32[9,16], index: 1, kind: input, shape index: {}]
  %s2 = inlined_call_operand.vmem [shape: f32[1,16], index: 2, kind: input, shape index: {}]
  %s3 = inlined_call_operand.vmem [shape: f32[9,16,16], index: 3, kind: input, shape index: {}]
  %s4 = inlined_call_operand.vmem [shape: f32[1,16], index: 4, kind: input, shape index: {}]
  %s5 = inlined_call_operand.vmem [shape: f32[2,3,48], index: 5, kind: output, shape index: {}]
  %s6 = sld [smem:[#allocation0]]
  $region53: #{conv2d_subsampling_forward.1} parent=0
    _
  %s8 = ssub.s32 1, %s6
  %s9 = scalar_select 0, %s8, %s6
  loop: start=0, step=1, limit=4
  $region2: #{conv2d_subsampling_forward.1} parent=0 // loop_pre_header
    _
  $region3: #{conv2d_subsampling_forward.1} parent=0 // loop_header
    %s11 = sphi 0, %s15
    %p12 = scmp.ge.s32.totalorder %s11, 4
    %s21 = sphi 0, %s23
    %s24 = sphi 0, %s21
    %s25 = sphi 0, %s24
    %s41 = sphi 0, %s25
    %s45 = sphi 0, %s45
    %s47 = sphi 0, %s45
    %s48 = sphi 0, %s47
    %s62 = sphi 0, %s48
    %s66 = sphi 0, %s66
    %s68 = sphi 0, %s66
    %s69 = sphi 0, %s68
    %s83 = sphi 0, %s69
    %s87 = sphi 0, %s87
    %s89 = sphi 0, %s87
    %s90 = sphi 0, %s89
    %s104 = sphi 0, %s90
    %s108 = sphi 0, %s108
    %s110 = sphi 0, %s108
    %s111 = sphi 0, %s110
    %s125 = sphi 0, %s111
    %s131 = sphi 0, %s133
    %s134 = sphi 0, %s131
    %s135 = sphi 0, %s134
    %s151 = sphi 0, %s135
  $region4: #{conv2d_subsampling_forward.1} parent=0 // loop_header_branch
    %14 = sbr.rel (%p12) target = $region8
  $region5: #{conv2d_subsampling_forward.1} parent=0 // loop_body
    %s16 = ssub.s32 %s11, 1
    %s17 = ssub.s32 %s11, 2
    %s18 = sadd.s32 %s11, 1
    %s19 = ssub.s32 %s11, %s18
    %p20 = scmp.eq.s32.totalorder %s19, 0
    %s22 = sadd.s32 %s21, 1
    %s23 = scalar_select %p20, %s21, %s22
    %p26 = pneg %p20
    %p27 = scmp.eq.s32.totalorder %s11, 1
    %p28 = por %p26, %p27
    %p29 = scmp.ne.s32.totalorder %s21, %s24
    %p30 = scmp.eq.s32.totalorder %s11, 0
    %p31 = por %p29, %p30
    %p32 = scmp.ne.s32.totalorder %s21, %s24
    %p33 = scmp.eq.s32.totalorder %s16, 1
    %p34 = por %p32, %p33
    %p35 = scmp.ne.s32.totalorder %s24, %s25
    %p36 = scmp.eq.s32.totalorder %s16, 0
    %p37 = por %p35, %p36
    %p38 = scmp.ne.s32.totalorder %s24, %s25
    %p39 = scmp.eq.s32.totalorder %s17, 1
    %p40 = por %p38, %p39
    %p42 = scmp.ne.s32.totalorder %s25, %s41
    %p43 = scmp.eq.s32.totalorder %s17, 0
    %p44 = por %p42, %p43
    %s46 = sadd.s32 %s45, 1
    %p49 = scmp.eq.s32.totalorder %s11, 1
    %p50 = scmp.ne.s32.totalorder %s45, %s47
    %p51 = scmp.eq.s32.totalorder %s11, 0
    %p52 = por %p50, %p51
    %p53 = scmp.ne.s32.totalorder %s45, %s47
    %p54 = scmp.eq.s32.totalorder %s16, 1
    %p55 = por %p53, %p54
    %p56 = scmp.ne.s32.totalorder %s47, %s48
    %p57 = scmp.eq.s32.totalorder %s16, 0
    %p58 = por %p56, %p57
    %p59 = scmp.ne.s32.totalorder %s47, %s48
    %p60 = scmp.eq.s32.totalorder %s17, 1
    %p61 = por %p59, %p60
    %p63 = scmp.ne.s32.totalorder %s48, %s62
    %p64 = scmp.eq.s32.totalorder %s17, 0
    %p65 = por %p63, %p64
    %s67 = sadd.s32 %s66, 1
    %p70 = scmp.eq.s32.totalorder %s11, 1
    %p71 = scmp.ne.s32.totalorder %s66, %s68
    %p72 = scmp.eq.s32.totalorder %s11, 0
    %p73 = por %p71, %p72
    %p74 = scmp.ne.s32.totalorder %s66, %s68
    %p75 = scmp.eq.s32.totalorder %s16, 1
    %p76 = por %p74, %p75
    %p77 = scmp.ne.s32.totalorder %s68, %s69
    %p78 = scmp.eq.s32.totalorder %s16, 0
    %p79 = por %p77, %p78
    %p80 = scmp.ne.s32.totalorder %s68, %s69
    %p81 = scmp.eq.s32.totalorder %s17, 1
    %p82 = por %p80, %p81
    %p84 = scmp.ne.s32.totalorder %s69, %s83
    %p85 = scmp.eq.s32.totalorder %s17, 0
    %p86 = por %p84, %p85
    %s88 = sadd.s32 %s87, 1
    %p91 = scmp.eq.s32.totalorder %s11, 1
    %p92 = scmp.ne.s32.totalorder %s87, %s89
    %p93 = scmp.eq.s32.totalorder %s11, 0
    %p94 = por %p92, %p93
    %p95 = scmp.ne.s32.totalorder %s87, %s89
    %p96 = scmp.eq.s32.totalorder %s16, 1
    %p97 = por %p95, %p96
    %p98 = scmp.ne.s32.totalorder %s89, %s90
    %p99 = scmp.eq.s32.totalorder %s16, 0
    %p100 = por %p98, %p99
    %p101 = scmp.ne.s32.totalorder %s89, %s90
    %p102 = scmp.eq.s32.totalorder %s17, 1
    %p103 = por %p101, %p102
    %p105 = scmp.ne.s32.totalorder %s90, %s104
    %p106 = scmp.eq.s32.totalorder %s17, 0
    %p107 = por %p105, %p106
    %s109 = sadd.s32 %s108, 1
    %p112 = scmp.eq.s32.totalorder %s11, 1
    %p113 = scmp.ne.s32.totalorder %s108, %s110
    %p114 = scmp.eq.s32.totalorder %s11, 0
    %p115 = por %p113, %p114
    %p116 = scmp.ne.s32.totalorder %s108, %s110
    %p117 = scmp.eq.s32.totalorder %s16, 1
    %p118 = por %p116, %p117
    %p119 = scmp.ne.s32.totalorder %s110, %s111
    %p120 = scmp.eq.s32.totalorder %s16, 0
    %p121 = por %p119, %p120
    %p122 = scmp.ne.s32.totalorder %s110, %s111
    %p123 = scmp.eq.s32.totalorder %s17, 1
    %p124 = por %p122, %p123
    %p126 = scmp.ne.s32.totalorder %s111, %s125
    %p127 = scmp.eq.s32.totalorder %s17, 0
    %p128 = por %p126, %p127
    %s129 = ssub.s32 %s11, %s18
    %p130 = scmp.eq.s32.totalorder %s129, 0
    %s132 = sadd.s32 %s131, 1
    %s133 = scalar_select %p130, %s131, %s132
    %p136 = pneg %p130
    %p137 = scmp.eq.s32.totalorder %s11, 1
    %p138 = por %p136, %p137
    %p139 = scmp.ne.s32.totalorder %s131, %s134
    %p140 = scmp.eq.s32.totalorder %s11, 0
    %p141 = por %p139, %p140
    %p142 = scmp.ne.s32.totalorder %s131, %s134
    %p143 = scmp.eq.s32.totalorder %s16, 1
    %p144 = por %p142, %p143
    %p145 = scmp.ne.s32.totalorder %s134, %s135
    %p146 = scmp.eq.s32.totalorder %s16, 0
    %p147 = por %p145, %p146
    %p148 = scmp.ne.s32.totalorder %s134, %s135
    %p149 = scmp.eq.s32.totalorder %s17, 1
    %p150 = por %p148, %p149
    %p152 = scmp.ne.s32.totalorder %s135, %s151
    %p153 = scmp.eq.s32.totalorder %s17, 0
    %p154 = por %p152, %p153
    %p155 = scmp.le.s32.totalorder 1, %s11
    %p156 = scmp.lt.s32.totalorder %s11, 3
    %p157 = pnand %p155, %p156
    %p158 = pneg %p157
    // Predicated region
    $region9: #{conv2d_subsampling_forward.1} parent=5 // pred_check
      _
    $region10: #{conv2d_subsampling_forward.1} parent=5 // pred_check_branch
      %160 = sbr.rel (%p157) target = $region12
    $region11: #{conv2d_subsampling_forward.1} parent=5 // pred_region
      %s161 = ssub.s32 %s11, 1
      // Predicated region
      $region13: #{conv2d_subsampling_forward.1} parent=11 // pred_check
        %p162 = pneg %p58
      $region14: #{conv2d_subsampling_forward.1} parent=11 // pred_check_branch
        %164 = sbr.rel (%p162) target = $region16
      $region15: #{conv2d_subsampling_forward.1} parent=11 // pred_region
        _
      $region16: #{conv2d_subsampling_forward.1} parent=11 // pred_fallthru
        _
      // Predicated region
      $region17: #{conv2d_subsampling_forward.1} parent=11 // pred_check
        %p165 = pneg %p79
      $region18: #{conv2d_subsampling_forward.1} parent=11 // pred_check_branch
        %167 = sbr.rel (%p165) target = $region20
      $region19: #{conv2d_subsampling_forward.1} parent=11 // pred_region
        _
      $region20: #{conv2d_subsampling_forward.1} parent=11 // pred_fallthru
        _
      // Predicated region
      $region21: #{conv2d_subsampling_forward.1} parent=11 // pred_check
        %p168 = pneg %p100
      $region22: #{conv2d_subsampling_forward.1} parent=11 // pred_check_branch
        %170 = sbr.rel (%p168) target = $region24
      $region23: #{conv2d_subsampling_forward.1} parent=11 // pred_region
        _
      $region24: #{conv2d_subsampling_forward.1} parent=11 // pred_fallthru
        _
      // Predicated region
      $region25: #{conv2d_subsampling_forward.1} parent=11 // pred_check
        %p171 = pneg %p121
      $region26: #{conv2d_subsampling_forward.1} parent=11 // pred_check_branch
        %173 = sbr.rel (%p171) target = $region28
      $region27: #{conv2d_subsampling_forward.1} parent=11 // pred_region
        _
      $region28: #{conv2d_subsampling_forward.1} parent=11 // pred_fallthru
        _
    $region12: #{conv2d_subsampling_forward.1} parent=5 // pred_fallthru
      _
    %p174 = scmp.lt.s32.totalorder %s11, 2
    // Predicated region
    $region29: #{conv2d_subsampling_forward.1} parent=5 // pred_check
      %p175 = pneg %p174
    $region30: #{conv2d_subsampling_forward.1} parent=5 // pred_check_branch
      %177 = sbr.rel (%p175) target = $region32
    $region31: #{conv2d_subsampling_forward.1} parent=5 // pred_region
      // Predicated region
      $region33: #{conv2d_subsampling_forward.1} parent=31 // pred_check
        %p178 = pneg %p31
      $region34: #{conv2d_subsampling_forward.1} parent=31 // pred_check_branch
        %180 = sbr.rel (%p178) target = $region36
      $region35: #{conv2d_subsampling_forward.1} parent=31 // pred_region
        %p181 = scmp.lt.s32.totalorder %s11, 1
        %s182 = scalar_select %p181, %s11, 1
        %s183 = smul.addr %s182, 8
        %s184 = smul.addr %s183, 8
        %s185 = scalar_lea.vmem %s0, %s184
      $region36: #{conv2d_subsampling_forward.1} parent=31 // pred_fallthru
        _
    $region32: #{conv2d_subsampling_forward.1} parent=5 // pred_fallthru
      _
    %p186 = scmp.le.s32.totalorder 1, %s11
    %p187 = scmp.lt.s32.totalorder %s11, 3
    %p188 = pnand %p186, %p187
    %p189 = pneg %p188
    // Predicated region
    $region37: #{conv2d_subsampling_forward.1} parent=5 // pred_check
      _
    $region38: #{conv2d_subsampling_forward.1} parent=5 // pred_check_branch
      %191 = sbr.rel (%p188) target = $region40
    $region39: #{conv2d_subsampling_forward.1} parent=5 // pred_region
      %s192 = ssub.s32 %s11, 1
      %p193 = scmp.lt.s32.totalorder %s16, 1
      %s194 = scalar_select %p193, %s16, 1
      %s195 = smul.addr %s194, 8
      %s196 = smul.addr %s195, 8
      %s197 = scalar_lea.vmem %s0, %s196
      %p198 = pneg %p37
      %p199 = pneg %p34
      %p200 = pneg %p58
      %p201 = pneg %p55
      %p202 = pneg %p79
      %p203 = pneg %p76
      %p204 = pneg %p100
      %p205 = pneg %p97
      %p206 = pneg %p121
      %p207 = pneg %p118
      %p208 = pneg %p147
      %p209 = pneg %p144
      %p210 = scmp.lt.s32.totalorder %s16, 1
      %s211 = scalar_select %p210, %s16, 1
      %s212 = smul.addr %s211, 4
      %s213 = scalar_lea.vmem %s5, %s212
      %p214 = scmp.lt.s32.totalorder %s16, 1
      %s215 = scalar_select %p214, %s16, 1
      %s216 = smul.addr %s215, 8
      %s217 = smul.addr %s216, 8
      %s218 = scalar_lea.vmem %s0, %s217
      %p219 = scmp.lt.s32.totalorder %s16, 1
      %s220 = scalar_select %p219, %s16, 1
      %s221 = smul.addr %s220, 4
      %s222 = scalar_lea.vmem %s5, %s221
      %v223 = vld [vmem:[%s1] sm:$0xff]
      %v224 = vld [vmem:[%s1 + $0x8] sm:$0x1]
      %v225 = vld [vmem:[%s2] sm:$0x1]
      %v226 = vld [vmem:[%s4] sm:$0x1]
      %v227 = vld [vmem:[%s218] sm:$0xff]
      %v228 = vld [vmem:[%s218 + $0x8] sm:$0xff]
      %v230 = vperm.slane %v225, 0
      %vm232 = vcmask 72704
      %v234 = vsel %vm232, %v227, 0
      %v237 = vsel %vm232, %v228, 0
      %vm239 = vcmask 1040384
      %v241 = vsel %vm239, %v224, 0
      %243 = vmatpush.msra.mxu0 0.0
      %244 = vmatpush.msra.mxu0 0.0
      %245 = vmatpush.msra.mxu0 0.0
      %246 = vmatpush.msra.mxu0 0.0
      %247 = vmatpush.msra.mxu0 0.0
      %248 = vmatpush.msra.mxu0 0.0
      %249 = vmatpush.msra.mxu0 0.0
      %250 = vmatpush.msra.mxu0 0.0
      %251 = vmatpush.msra.mxu0 0.0
      %252 = vmatpush.msra.mxu0 0.0
      %253 = vmatpush.msra.mxu0 0.0
      %254 = vmatpush.msra.mxu0 0.0
      %255 = vmatpush.msra.mxu0 0.0
      %256 = vmatpush.msra.mxu0 0.0
      %257 = vmatpush.msra.mxu0 %v241
      %258 = vmatpush.msra.mxu0 %v223
      %259 = vmatmul.f32.gmra.mxu0 %v234
      %v260 = vpop.f32.mrf.mxu0
      %v261 = vadd.f32 %v230, %v260
      %262 = vmatmul.f32.gmra.mxu0 %v237
      %v263 = vpop.f32.mrf.mxu0
      %v264 = vadd.f32 %v230, %v263
      %265 = vdwg.mxu0
      %v266 = vmax.f32 %v261, 0.0
      %v267 = vmax.f32 %v264, 0.0
      %v270 = vrot.slane %v266, 4
      %v271 = vrot.slane %v267, 4
      %s272 = scalar_lea.vmem %s218, 16
      %v273 = vld [vmem:[%s272] sm:$0xff]
      %v274 = vld [vmem:[%s272 + $0x8] sm:$0xff]
      %v276 = vsel %vm232, %v273, 0
      %v279 = vsel %vm232, %v274, 0
      %281 = vmatpush.msra.mxu0 0.0
      %282 = vmatpush.msra.mxu0 0.0
      %283 = vmatpush.msra.mxu0 0.0
      %284 = vmatpush.msra.mxu0 0.0
      %285 = vmatpush.msra.mxu0 0.0
      %286 = vmatpush.msra.mxu0 0.0
      %287 = vmatpush.msra.mxu0 0.0
      %288 = vmatpush.msra.mxu0 0.0
      %289 = vmatpush.msra.mxu0 0.0
      %290 = vmatpush.msra.mxu0 0.0
      %291 = vmatpush.msra.mxu0 0.0
      %292 = vmatpush.msra.mxu0 0.0
      %293 = vmatpush.msra.mxu0 0.0
      %294 = vmatpush.msra.mxu0 0.0
      %295 = vmatpush.msra.mxu0 %v241
      %296 = vmatpush.msra.mxu0 %v223
      %297 = vmatmul.f32.gmra.mxu0 %v276
      %v298 = vpop.f32.mrf.mxu0
      %v299 = vadd.f32 %v230, %v298
      %300 = vmatmul.f32.gmra.mxu0 %v279
      %v301 = vpop.f32.mrf.mxu0
      %v302 = vadd.f32 %v230, %v301
      %303 = vdwg.mxu0
      %v304 = vmax.f32 %v299, 0.0
      %v305 = vmax.f32 %v302, 0.0
      %v308 = vrot.slane %v304, 4
      %v309 = vrot.slane %v305, 4
      %s310 = scalar_lea.vmem %s218, 32
      %v311 = vld [vmem:[%s310] sm:$0xff]
      %v312 = vld [vmem:[%s310 + $0x8] sm:$0xff]
      %v314 = vsel %vm232, %v311, 0
      %v317 = vsel %vm232, %v312, 0
      %319 = vmatpush.msra.mxu0 0.0
      %320 = vmatpush.msra.mxu0 0.0
      %321 = vmatpush.msra.mxu0 0.0
      %322 = vmatpush.msra.mxu0 0.0
      %323 = vmatpush.msra.mxu0 0.0
      %324 = vmatpush.msra.mxu0 0.0
      %325 = vmatpush.msra.mxu0 0.0
      %326 = vmatpush.msra.mxu0 0.0
      %327 = vmatpush.msra.mxu0 0.0
      %328 = vmatpush.msra.mxu0 0.0
      %329 = vmatpush.msra.mxu0 0.0
      %330 = vmatpush.msra.mxu0 0.0
      %331 = vmatpush.msra.mxu0 0.0
      %332 = vmatpush.msra.mxu0 0.0
      %333 = vmatpush.msra.mxu0 %v241
      %334 = vmatpush.msra.mxu0 %v223
      %335 = vmatmul.f32.gmra.mxu0 %v314
      %v336 = vpop.f32.mrf.mxu0
      %v337 = vadd.f32 %v230, %v336
      %338 = vmatmul.f32.gmra.mxu0 %v317
      %v339 = vpop.f32.mrf.mxu0
      %v340 = vadd.f32 %v230, %v339
      %341 = vdwg.mxu0
      %v342 = vmax.f32 %v337, 0.0
      %v343 = vmax.f32 %v340, 0.0
      %v346 = vrot.slane %v342, 4
      %s347 = scalar_lea.vmem %s218, 48
      %v348 = vld [vmem:[%s347] sm:$0xff]
      %v349 = vld [vmem:[%s347 + $0x8] sm:$0xff]
      %v351 = vsel %vm232, %v348, 0
      %v354 = vsel %vm232, %v349, 0
      %356 = vmatpush.msra.mxu0 0.0
      %357 = vmatpush.msra.mxu0 0.0
      %358 = vmatpush.msra.mxu0 0.0
      %359 = vmatpush.msra.mxu0 0.0
      %360 = vmatpush.msra.mxu0 0.0
      %361 = vmatpush.msra.mxu0 0.0
      %362 = vmatpush.msra.mxu0 0.0
      %363 = vmatpush.msra.mxu0 0.0
      %364 = vmatpush.msra.mxu0 0.0
      %365 = vmatpush.msra.mxu0 0.0
      %366 = vmatpush.msra.mxu0 0.0
      %367 = vmatpush.msra.mxu0 0.0
      %368 = vmatpush.msra.mxu0 0.0
      %369 = vmatpush.msra.mxu0 0.0
      %370 = vmatpush.msra.mxu0 %v241
      %371 = vmatpush.msra.mxu0 %v223
      %372 = vmatmul.f32.gmra.mxu0 %v351
      %v373 = vpop.f32.mrf.mxu0
      %v374 = vadd.f32 %v230, %v373
      %375 = vmatmul.f32.gmra.mxu0 %v354
      %v376 = vpop.f32.mrf.mxu0
      %v377 = vadd.f32 %v230, %v376
      %378 = vdwg.mxu0
      %v379 = vmax.f32 %v374, 0.0
      %v380 = vmax.f32 %v377, 0.0
      %v383 = vrot.slane %v379, 4
      %v384 = vrot.slane %v266, 3
      %v385 = vrot.slane %v270, 3
      %v386 = vrot.slane %v267, 3
      %v387 = vsel %vm239, %v266, %v384
      %vm388 = vcmask 1041409
      %v389 = vsel %vm388, %v266, %v384
      %v390 = vrot.slane %v389, 1
      %vm391 = vcmask 1042434
      %v392 = vsel %vm391, %v266, %v384
      %v393 = vrot.slane %v392, 2
      %v394 = vsel %vm239, %v270, %v385
      %v395 = vsel %vm388, %v270, %v385
      %v396 = vrot.slane %v395, 1
      %v397 = vsel %vm391, %v270, %v385
      %v398 = vrot.slane %v397, 2
      %v399 = vsel %vm239, %v267, %v386
      %v400 = vsel %vm388, %v267, %v386
      %v401 = vrot.slane %v400, 1
      %v402 = vsel %vm391, %v267, %v386
      %v403 = vrot.slane %v402, 2
      %v404 = vld [vmem:[%s3] sm:$0xff]
      %v405 = vld [vmem:[%s3 + $0x8] sm:$0xff]
      %v406 = vrot.slane %v304, 3
      %v407 = vrot.slane %v308, 3
      %v408 = vrot.slane %v305, 3
      %v409 = vsel %vm239, %v304, %v406
      %v410 = vsel %vm388, %v304, %v406
      %v411 = vrot.slane %v410, 1
      %v412 = vsel %vm391, %v304, %v406
      %v413 = vrot.slane %v412, 2
      %v414 = vsel %vm239, %v308, %v407
      %v415 = vsel %vm388, %v308, %v407
      %v416 = vrot.slane %v415, 1
      %v417 = vsel %vm391, %v308, %v407
      %v418 = vrot.slane %v417, 2
      %v419 = vsel %vm239, %v305, %v408
      %v420 = vsel %vm388, %v305, %v408
      %v421 = vrot.slane %v420, 1
      %v422 = vsel %vm391, %v305, %v408
      %v423 = vrot.slane %v422, 2
      %s424 = scalar_lea.vmem %s3, 16
      %v425 = vld [vmem:[%s424] sm:$0xff]
      %v426 = vld [vmem:[%s424 + $0x8] sm:$0xff]
      %427 = vst [vmem:[#allocation1] ss:$9 sm:$0xff] %v409
      %s428 = scalar_lea.vmem [#allocation1], 1
      %429 = vst [vmem:[%s428] ss:$9 sm:$0xff] %v411
      %s430 = scalar_lea.vmem [#allocation1], 2
      %431 = vst [vmem:[%s430] ss:$9 sm:$0xff] %v413
      %s432 = scalar_lea.vmem [#allocation1], 3
      %433 = vst [vmem:[%s432] ss:$9 sm:$0xff] %v414
      %s434 = scalar_lea.vmem [#allocation1], 4
      %435 = vst [vmem:[%s434] ss:$9 sm:$0xff] %v416
      %s436 = scalar_lea.vmem [#allocation1], 5
      %437 = vst [vmem:[%s436] ss:$9 sm:$0xff] %v418
      %s438 = scalar_lea.vmem [#allocation1], 6
      %439 = vst [vmem:[%s438] ss:$9 sm:$0xff] %v419
      %s440 = scalar_lea.vmem [#allocation1], 7
      %441 = vst [vmem:[%s440] ss:$9 sm:$0xff] %v421
      %v442 = vld [vmem:[#allocation1] sm:$0xff]
      %443 = vst [vmem:[#allocation1] ss:$9 sm:$0xff] %v423
      %v444 = vld [vmem:[#allocation1] sm:$0xff]
      %vm445 = vcmask 130048
      %v446 = vsel %vm445, %v442, 0
      %v448 = vsel %vm445, %v444, 0
      %450 = vmatpush.msra.mxu0 0.0
      %451 = vmatpush.msra.mxu0 0.0
      %452 = vmatpush.msra.mxu0 0.0
      %453 = vmatpush.msra.mxu0 0.0
      %454 = vmatpush.msra.mxu0 0.0
      %455 = vmatpush.msra.mxu0 0.0
      %456 = vmatpush.msra.mxu0 0.0
      %457 = vmatpush.msra.mxu0 0.0
      %458 = vmatpush.msra.mxu0 0.0
      %459 = vmatpush.msra.mxu0 0.0
      %460 = vmatpush.msra.mxu0 0.0
      %461 = vmatpush.msra.mxu0 0.0
      %462 = vmatpush.msra.mxu0 0.0
      %463 = vmatpush.msra.mxu0 0.0
      %464 = vmatpush.msra.mxu0 %v426
      %465 = vmatpush.msra.mxu0 %v425
      %466 = vmatmul.f32.gmra.mxu0 %v446
      %v467 = vpop.f32.mrf.mxu0
      %v468 = vadd.f32 0.0, %v467
      %469 = vmatmul.f32.gmra.mxu0 %v448
      %v470 = vpop.f32.mrf.mxu0
      %v471 = vadd.f32 0.0, %v470
      %472 = vdwg.mxu0
      %473 = vst [vmem:[#allocation1] ss:$9 sm:$0xff] %v387
      %s474 = scalar_lea.vmem [#allocation1], 1
      %475 = vst [vmem:[%s474] ss:$9 sm:$0xff] %v390
      %s476 = scalar_lea.vmem [#allocation1], 2
      %477 = vst [vmem:[%s476] ss:$9 sm:$0xff] %v393
      %s478 = scalar_lea.vmem [#allocation1], 3
      %479 = vst [vmem:[%s478] ss:$9 sm:$0xff] %v394
      %s480 = scalar_lea.vmem [#allocation1], 4
      %481 = vst [vmem:[%s480] ss:$9 sm:$0xff] %v396
      %s482 = scalar_lea.vmem [#allocation1], 5
      %483 = vst [vmem:[%s482] ss:$9 sm:$0xff] %v398
      %s484 = scalar_lea.vmem [#allocation1], 6
      %485 = vst [vmem:[%s484] ss:$9 sm:$0xff] %v399
      %s486 = scalar_lea.vmem [#allocation1], 7
      %487 = vst [vmem:[%s486] ss:$9 sm:$0xff] %v401
      %v488 = vld [vmem:[#allocation1] sm:$0xff]
      %489 = vst [vmem:[#allocation1] ss:$9 sm:$0xff] %v403
      %v490 = vld [vmem:[#allocation1] sm:$0xff]
      %v491 = vsel %vm445, %v488, 0
      %v493 = vsel %vm445, %v490, 0
      %495 = vmatpush.msra.mxu0 0.0
      %496 = vmatpush.msra.mxu0 0.0
      %497 = vmatpush.msra.mxu0 0.0
      %498 = vmatpush.msra.mxu0 0.0
      %499 = vmatpush.msra.mxu0 0.0
      %500 = vmatpush.msra.mxu0 0.0
      %501 = vmatpush.msra.mxu0 0.0
      %502 = vmatpush.msra.mxu0 0.0
      %503 = vmatpush.msra.mxu0 0.0
      %504 = vmatpush.msra.mxu0 0.0
      %505 = vmatpush.msra.mxu0 0.0
      %506 = vmatpush.msra.mxu0 0.0
      %507 = vmatpush.msra.mxu0 0.0
      %508 = vmatpush.msra.mxu0 0.0
      %509 = vmatpush.msra.mxu0 %v405
      %510 = vmatpush.msra.mxu0 %v404
      %511 = vmatmul.f32.gmra.mxu0 %v491
      %v512 = vpop.f32.mrf.mxu0
      %v513 = vadd.f32 %v468, %v512
      %514 = vmatmul.f32.gmra.mxu0 %v493
      %v515 = vpop.f32.mrf.mxu0
      %v516 = vadd.f32 %v471, %v515
      %517 = vdwg.mxu0
      %518 = vst [vmem:[#allocation1] sm:$0xff] %v266
      %s519 = scalar_lea.vmem [#allocation1], 1
      %v520 = vld [vmem:[%s519] ss:$4 sm:$0xff]
      %s521 = scalar_lea.vmem [#allocation1], 2
      %v522 = vld [vmem:[%s521] ss:$4 sm:$0xff]
      %s523 = scalar_lea.vmem [#allocation1], 3
      %v524 = vld [vmem:[%s523] ss:$4 sm:$0xff]
      %525 = vst [vmem:[#allocation1 + $0x20] sm:$0xff] %v270
      %s526 = scalar_lea.vmem [#allocation1], 33
      %v527 = vld [vmem:[%s526] ss:$4 sm:$0xff]
      %s528 = scalar_lea.vmem [#allocation1], 34
      %v529 = vld [vmem:[%s528] ss:$4 sm:$0xff]
      %s530 = scalar_lea.vmem [#allocation1], 35
      %v531 = vld [vmem:[%s530] ss:$4 sm:$0xff]
      %532 = vst [vmem:[#allocation1] sm:$0xff] %v267
      %v533 = vld [vmem:[%s519] ss:$4 sm:$0xff]
      %v534 = vld [vmem:[%s521] ss:$4 sm:$0xff]
      %v535 = vld [vmem:[%s523] ss:$4 sm:$0xff]
      %s536 = scalar_lea.vmem %s3, 32
      %v537 = vld [vmem:[%s536] sm:$0xff]
      %v538 = vld [vmem:[%s536 + $0x8] sm:$0xff]
      %539 = vst [vmem:[#allocation1] ss:$9 sm:$0xff] %v520
      %s540 = scalar_lea.vmem [#allocation1], 1
      %541 = vst [vmem:[%s540] ss:$9 sm:$0xff] %v522
      %s542 = scalar_lea.vmem [#allocation1], 2
      %543 = vst [vmem:[%s542] ss:$9 sm:$0xff] %v524
      %s544 = scalar_lea.vmem [#allocation1], 3
      %545 = vst [vmem:[%s544] ss:$9 sm:$0xff] %v527
      %s546 = scalar_lea.vmem [#allocation1], 4
      %547 = vst [vmem:[%s546] ss:$9 sm:$0xff] %v529
      %s548 = scalar_lea.vmem [#allocation1], 5
      %549 = vst [vmem:[%s548] ss:$9 sm:$0xff] %v531
      %s550 = scalar_lea.vmem [#allocation1], 6
      %551 = vst [vmem:[%s550] ss:$9 sm:$0xff] %v533
      %s552 = scalar_lea.vmem [#allocation1], 7
      %553 = vst [vmem:[%s552] ss:$9 sm:$0xff] %v534
      %v554 = vld [vmem:[#allocation1] sm:$0xff]
      %555 = vst [vmem:[#allocation1] ss:$9 sm:$0xff] %v535
      %v556 = vld [vmem:[#allocation1] sm:$0xff]
      %v557 = vsel %vm445, %v554, 0
      %v559 = vsel %vm445, %v556, 0
      %561 = vmatpush.msra.mxu0 0.0
      %562 = vmatpush.msra.mxu0 0.0
      %563 = vmatpush.msra.mxu0 0.0
      %564 = vmatpush.msra.mxu0 0.0
      %565 = vmatpush.msra.mxu0 0.0
      %566 = vmatpush.msra.mxu0 0.0
      %567 = vmatpush.msra.mxu0 0.0
      %568 = vmatpush.msra.mxu0 0.0
      %569 = vmatpush.msra.mxu0 0.0
      %570 = vmatpush.msra.mxu0 0.0
      %571 = vmatpush.msra.mxu0 0.0
      %572 = vmatpush.msra.mxu0 0.0
      %573 = vmatpush.msra.mxu0 0.0
      %574 = vmatpush.msra.mxu0 0.0
      %575 = vmatpush.msra.mxu0 %v538
      %576 = vmatpush.msra.mxu0 %v537
      %577 = vmatmul.f32.gmra.mxu0 %v557
      %v578 = vpop.f32.mrf.mxu0
      %v579 = vadd.f32 0.0, %v578
      %580 = vmatmul.f32.gmra.mxu0 %v559
      %v581 = vpop.f32.mrf.mxu0
      %v582 = vadd.f32 0.0, %v581
      %583 = vdwg.mxu0
      %v584 = vadd.f32 %v513, %v579
      %v585 = vadd.f32 %v516, %v582
      %v586 = vrot.slane %v342, 3
      %v587 = vrot.slane %v346, 3
      %v588 = vrot.slane %v343, 3
      %v589 = vsel %vm239, %v342, %v586
      %v590 = vsel %vm388, %v342, %v586
      %v591 = vrot.slane %v590, 1
      %v592 = vsel %vm391, %v342, %v586
      %v593 = vrot.slane %v592, 2
      %v594 = vsel %vm239, %v346, %v587
      %v595 = vsel %vm388, %v346, %v587
      %v596 = vrot.slane %v595, 1
      %v597 = vsel %vm391, %v346, %v587
      %v598 = vrot.slane %v597, 2
      %v599 = vsel %vm239, %v343, %v588
      %v600 = vsel %vm388, %v343, %v588
      %v601 = vrot.slane %v600, 1
      %v602 = vsel %vm391, %v343, %v588
      %v603 = vrot.slane %v602, 2
      %s604 = scalar_lea.vmem %s3, 48
      %v605 = vld [vmem:[%s604] sm:$0xff]
      %v606 = vld [vmem:[%s604 + $0x8] sm:$0xff]
      %607 = vst [vmem:[#allocation1] ss:$9 sm:$0xff] %v589
      %s608 = scalar_lea.vmem [#allocation1], 1
      %609 = vst [vmem:[%s608] ss:$9 sm:$0xff] %v591
      %s610 = scalar_lea.vmem [#allocation1], 2
      %611 = vst [vmem:[%s610] ss:$9 sm:$0xff] %v593
      %s612 = scalar_lea.vmem [#allocation1], 3
      %613 = vst [vmem:[%s612] ss:$9 sm:$0xff] %v594
      %s614 = scalar_lea.vmem [#allocation1], 4
      %615 = vst [vmem:[%s614] ss:$9 sm:$0xff] %v596
      %s616 = scalar_lea.vmem [#allocation1], 5
      %617 = vst [vmem:[%s616] ss:$9 sm:$0xff] %v598
      %s618 = scalar_lea.vmem [#allocation1], 6
      %619 = vst [vmem:[%s618] ss:$9 sm:$0xff] %v599
      %s620 = scalar_lea.vmem [#allocation1], 7
      %621 = vst [vmem:[%s620] ss:$9 sm:$0xff] %v601
      %v622 = vld [vmem:[#allocation1] sm:$0xff]
      %623 = vst [vmem:[#allocation1] ss:$9 sm:$0xff] %v603
      %v624 = vld [vmem:[#allocation1] sm:$0xff]
      %v625 = vsel %vm445, %v622, 0
      %v627 = vsel %vm445, %v624, 0
      %629 = vmatpush.msra.mxu0 0.0
      %630 = vmatpush.msra.mxu0 0.0
      %631 = vmatpush.msra.mxu0 0.0
      %632 = vmatpush.msra.mxu0 0.0
      %633 = vmatpush.msra.mxu0 0.0
      %634 = vmatpush.msra.mxu0 0.0
      %635 = vmatpush.msra.mxu0 0.0
      %636 = vmatpush.msra.mxu0 0.0
      %637 = vmatpush.msra.mxu0 0.0
      %638 = vmatpush.msra.mxu0 0.0
      %639 = vmatpush.msra.mxu0 0.0
      %640 = vmatpush.msra.mxu0 0.0
      %641 = vmatpush.msra.mxu0 0.0
      %642 = vmatpush.msra.mxu0 0.0
      %643 = vmatpush.msra.mxu0 %v606
      %644 = vmatpush.msra.mxu0 %v605
      %645 = vmatmul.f32.gmra.mxu0 %v625
      %v646 = vpop.f32.mrf.mxu0
      %v647 = vadd.f32 0.0, %v646
      %648 = vmatmul.f32.gmra.mxu0 %v627
      %v649 = vpop.f32.mrf.mxu0
      %v650 = vadd.f32 0.0, %v649
      %651 = vdwg.mxu0
      %v652 = vadd.f32 %v584, %v647
      %v653 = vadd.f32 %v585, %v650
      %v654 = vrot.slane %v379, 3
      %v655 = vrot.slane %v383, 3
      %v656 = vrot.slane %v380, 3
      %v657 = vsel %vm239, %v379, %v654
      %v658 = vsel %vm388, %v379, %v654
      %v659 = vrot.slane %v658, 1
      %v660 = vsel %vm391, %v379, %v654
      %v661 = vrot.slane %v660, 2
      %v662 = vsel %vm239, %v383, %v655
      %v663 = vsel %vm388, %v383, %v655
      %v664 = vrot.slane %v663, 1
      %v665 = vsel %vm391, %v383, %v655
      %v666 = vrot.slane %v665, 2
      %v667 = vsel %vm239, %v380, %v656
      %v668 = vsel %vm388, %v380, %v656
      %v669 = vrot.slane %v668, 1
      %v670 = vsel %vm391, %v380, %v656
      %v671 = vrot.slane %v670, 2
      %s672 = scalar_lea.vmem %s3, 64
      %v673 = vld [vmem:[%s672] sm:$0xff]
      %v674 = vld [vmem:[%s672 + $0x8] sm:$0xff]
      %675 = vst [vmem:[#allocation1] ss:$9 sm:$0xff] %v657
      %s676 = scalar_lea.vmem [#allocation1], 1
      %677 = vst [vmem:[%s676] ss:$9 sm:$0xff] %v659
      %s678 = scalar_lea.vmem [#allocation1], 2
      %679 = vst [vmem:[%s678] ss:$9 sm:$0xff] %v661
      %s680 = scalar_lea.vmem [#allocation1], 3
      %681 = vst [vmem:[%s680] ss:$9 sm:$0xff] %v662
      %s682 = scalar_lea.vmem [#allocation1], 4
      %683 = vst [vmem:[%s682] ss:$9 sm:$0xff] %v664
      %s684 = scalar_lea.vmem [#allocation1], 5
      %685 = vst [vmem:[%s684] ss:$9 sm:$0xff] %v666
      %s686 = scalar_lea.vmem [#allocation1], 6
      %687 = vst [vmem:[%s686] ss:$9 sm:$0xff] %v667
      %s688 = scalar_lea.vmem [#allocation1], 7
      %689 = vst [vmem:[%s688] ss:$9 sm:$0xff] %v669
      %v690 = vld [vmem:[#allocation1] sm:$0xff]
      %691 = vst [vmem:[#allocation1] ss:$9 sm:$0xff] %v671
      %v692 = vld [vmem:[#allocation1] sm:$0xff]
      %v693 = vsel %vm445, %v690, 0
      %v695 = vsel %vm445, %v692, 0
      %697 = vmatpush.msra.mxu0 0.0
      %698 = vmatpush.msra.mxu0 0.0
      %699 = vmatpush.msra.mxu0 0.0
      %700 = vmatpush.msra.mxu0 0.0
      %701 = vmatpush.msra.mxu0 0.0
      %702 = vmatpush.msra.mxu0 0.0
      %703 = vmatpush.msra.mxu0 0.0
      %704 = vmatpush.msra.mxu0 0.0
      %705 = vmatpush.msra.mxu0 0.0
      %706 = vmatpush.msra.mxu0 0.0
      %707 = vmatpush.msra.mxu0 0.0
      %708 = vmatpush.msra.mxu0 0.0
      %709 = vmatpush.msra.mxu0 0.0
      %710 = vmatpush.msra.mxu0 0.0
      %711 = vmatpush.msra.mxu0 %v674
      %712 = vmatpush.msra.mxu0 %v673
      %713 = vmatmul.f32.gmra.mxu0 %v693
      %v714 = vpop.f32.mrf.mxu0
      %v715 = vadd.f32 0.0, %v714
      %716 = vmatmul.f32.gmra.mxu0 %v695
      %v717 = vpop.f32.mrf.mxu0
      %v718 = vadd.f32 0.0, %v717
      %719 = vdwg.mxu0
      %v720 = vadd.f32 %v652, %v715
      %v721 = vadd.f32 %v653, %v718
      %722 = vst [vmem:[#allocation1] sm:$0xff] %v342
      %s723 = scalar_lea.vmem [#allocation1], 1
      %v724 = vld [vmem:[%s723] ss:$4 sm:$0xff]
      %s725 = scalar_lea.vmem [#allocation1], 2
      %v726 = vld [vmem:[%s725] ss:$4 sm:$0xff]
      %s727 = scalar_lea.vmem [#allocation1], 3
      %v728 = vld [vmem:[%s727] ss:$4 sm:$0xff]
      %729 = vst [vmem:[#allocation1 + $0x20] sm:$0xff] %v346
      %s730 = scalar_lea.vmem [#allocation1], 33
      %v731 = vld [vmem:[%s730] ss:$4 sm:$0xff]
      %s732 = scalar_lea.vmem [#allocation1], 34
      %v733 = vld [vmem:[%s732] ss:$4 sm:$0xff]
      %s734 = scalar_lea.vmem [#allocation1], 35
      %v735 = vld [vmem:[%s734] ss:$4 sm:$0xff]
      %736 = vst [vmem:[#allocation1] sm:$0xff] %v343
      %v737 = vld [vmem:[%s723] ss:$4 sm:$0xff]
      %v738 = vld [vmem:[%s725] ss:$4 sm:$0xff]
      %v739 = vld [vmem:[%s727] ss:$4 sm:$0xff]
      %s740 = scalar_lea.vmem %s3, 80
      %v741 = vld [vmem:[%s740] sm:$0xff]
      %v742 = vld [vmem:[%s740 + $0x8] sm:$0xff]
      %743 = vst [vmem:[#allocation1] ss:$9 sm:$0xff] %v724
      %s744 = scalar_lea.vmem [#allocation1], 1
      %745 = vst [vmem:[%s744] ss:$9 sm:$0xff] %v726
      %s746 = scalar_lea.vmem [#allocation1], 2
      %747 = vst [vmem:[%s746] ss:$9 sm:$0xff] %v728
      %s748 = scalar_lea.vmem [#allocation1], 3
      %749 = vst [vmem:[%s748] ss:$9 sm:$0xff] %v731
      %s750 = scalar_lea.vmem [#allocation1], 4
      %751 = vst [vmem:[%s750] ss:$9 sm:$0xff] %v733
      %s752 = scalar_lea.vmem [#allocation1], 5
      %753 = vst [vmem:[%s752] ss:$9 sm:$0xff] %v735
      %s754 = scalar_lea.vmem [#allocation1], 6
      %755 = vst [vmem:[%s754] ss:$9 sm:$0xff] %v737
      %s756 = scalar_lea.vmem [#allocation1], 7
      %757 = vst [vmem:[%s756] ss:$9 sm:$0xff] %v738
      %v758 = vld [vmem:[#allocation1] sm:$0xff]
      %759 = vst [vmem:[#allocation1] ss:$9 sm:$0xff] %v739
      %v760 = vld [vmem:[#allocation1] sm:$0xff]
      %v761 = vsel %vm445, %v758, 0
      %v763 = vsel %vm445, %v760, 0
      %765 = vmatpush.msra.mxu0 0.0
      %766 = vmatpush.msra.mxu0 0.0
      %767 = vmatpush.msra.mxu0 0.0
      %768 = vmatpush.msra.mxu0 0.0
      %769 = vmatpush.msra.mxu0 0.0
      %770 = vmatpush.msra.mxu0 0.0
      %771 = vmatpush.msra.mxu0 0.0
      %772 = vmatpush.msra.mxu0 0.0
      %773 = vmatpush.msra.mxu0 0.0
      %774 = vmatpush.msra.mxu0 0.0
      %775 = vmatpush.msra.mxu0 0.0
      %776 = vmatpush.msra.mxu0 0.0
      %777 = vmatpush.msra.mxu0 0.0
      %778 = vmatpush.msra.mxu0 0.0
      %779 = vmatpush.msra.mxu0 %v742
      %780 = vmatpush.msra.mxu0 %v741
      %781 = vmatmul.f32.gmra.mxu0 %v761
      %v782 = vpop.f32.mrf.mxu0
      %v783 = vadd.f32 0.0, %v782
      %784 = vmatmul.f32.gmra.mxu0 %v763
      %v785 = vpop.f32.mrf.mxu0
      %v786 = vadd.f32 0.0, %v785
      %787 = vdwg.mxu0
      %v788 = vadd.f32 %v720, %v783
      %v789 = vadd.f32 %v721, %v786
      %v790 = vrot.slane %v271, 3
      %v791 = vsel %vm239, %v271, %v790
      %v792 = vsel %vm388, %v271, %v790
      %v793 = vrot.slane %v792, 1
      %v794 = vsel %vm391, %v271, %v790
      %v795 = vrot.slane %v794, 2
      %s796 = scalar_lea.vmem %s3, 96
      %v797 = vld [vmem:[%s796] sm:$0xff]
      %v798 = vld [vmem:[%s796 + $0x8] sm:$0xff]
      %799 = vst [vmem:[#allocation1] ss:$9 sm:$0xff] %v394
      %s800 = scalar_lea.vmem [#allocation1], 1
      %801 = vst [vmem:[%s800] ss:$9 sm:$0xff] %v396
      %s802 = scalar_lea.vmem [#allocation1], 2
      %803 = vst [vmem:[%s802] ss:$9 sm:$0xff] %v398
      %s804 = scalar_lea.vmem [#allocation1], 3
      %805 = vst [vmem:[%s804] ss:$9 sm:$0xff] %v399
      %s806 = scalar_lea.vmem [#allocation1], 4
      %807 = vst [vmem:[%s806] ss:$9 sm:$0xff] %v401
      %s808 = scalar_lea.vmem [#allocation1], 5
      %809 = vst [vmem:[%s808] ss:$9 sm:$0xff] %v403
      %s810 = scalar_lea.vmem [#allocation1], 6
      %811 = vst [vmem:[%s810] ss:$9 sm:$0xff] %v791
      %s812 = scalar_lea.vmem [#allocation1], 7
      %813 = vst [vmem:[%s812] ss:$9 sm:$0xff] %v793
      %v814 = vld [vmem:[#allocation1] sm:$0xff]
      %815 = vst [vmem:[#allocation1] ss:$9 sm:$0xff] %v795
      %v816 = vld [vmem:[#allocation1] sm:$0xff]
      %v817 = vsel %vm445, %v814, 0
      %v819 = vsel %vm445, %v816, 0
      %821 = vmatpush.msra.mxu0 0.0
      %822 = vmatpush.msra.mxu0 0.0
      %823 = vmatpush.msra.mxu0 0.0
      %824 = vmatpush.msra.mxu0 0.0
      %825 = vmatpush.msra.mxu0 0.0
      %826 = vmatpush.msra.mxu0 0.0
      %827 = vmatpush.msra.mxu0 0.0
      %828 = vmatpush.msra.mxu0 0.0
      %829 = vmatpush.msra.mxu0 0.0
      %830 = vmatpush.msra.mxu0 0.0
      %831 = vmatpush.msra.mxu0 0.0
      %832 = vmatpush.msra.mxu0 0.0
      %833 = vmatpush.msra.mxu0 0.0
      %834 = vmatpush.msra.mxu0 0.0
      %835 = vmatpush.msra.mxu0 %v798
      %836 = vmatpush.msra.mxu0 %v797
      %837 = vmatmul.f32.gmra.mxu0 %v817
      %v838 = vpop.f32.mrf.mxu0
      %v839 = vadd.f32 0.0, %v838
      %840 = vmatmul.f32.gmra.mxu0 %v819
      %v841 = vpop.f32.mrf.mxu0
      %v842 = vadd.f32 0.0, %v841
      %843 = vdwg.mxu0
      %v844 = vadd.f32 %v788, %v839
      %v845 = vadd.f32 %v789, %v842
      %v846 = vrot.slane %v309, 3
      %v847 = vsel %vm239, %v309, %v846
      %v848 = vsel %vm388, %v309, %v846
      %v849 = vrot.slane %v848, 1
      %v850 = vsel %vm391, %v309, %v846
      %v851 = vrot.slane %v850, 2
      %s852 = scalar_lea.vmem %s3, 112
      %v853 = vld [vmem:[%s852] sm:$0xff]
      %v854 = vld [vmem:[%s852 + $0x8] sm:$0xff]
      %855 = vst [vmem:[#allocation1] ss:$9 sm:$0xff] %v414
      %s856 = scalar_lea.vmem [#allocation1], 1
      %857 = vst [vmem:[%s856] ss:$9 sm:$0xff] %v416
      %s858 = scalar_lea.vmem [#allocation1], 2
      %859 = vst [vmem:[%s858] ss:$9 sm:$0xff] %v418
      %s860 = scalar_lea.vmem [#allocation1], 3
      %861 = vst [vmem:[%s860] ss:$9 sm:$0xff] %v419
      %s862 = scalar_lea.vmem [#allocation1], 4
      %863 = vst [vmem:[%s862] ss:$9 sm:$0xff] %v421
      %s864 = scalar_lea.vmem [#allocation1], 5
      %865 = vst [vmem:[%s864] ss:$9 sm:$0xff] %v423
      %s866 = scalar_lea.vmem [#allocation1], 6
      %867 = vst [vmem:[%s866] ss:$9 sm:$0xff] %v847
      %s868 = scalar_lea.vmem [#allocation1], 7
      %869 = vst [vmem:[%s868] ss:$9 sm:$0xff] %v849
      %v870 = vld [vmem:[#allocation1] sm:$0xff]
      %871 = vst [vmem:[#allocation1] ss:$9 sm:$0xff] %v851
      %v872 = vld [vmem:[#allocation1] sm:$0xff]
      %v873 = vsel %vm445, %v870, 0
      %v875 = vsel %vm445, %v872, 0
      %877 = vmatpush.msra.mxu0 0.0
      %878 = vmatpush.msra.mxu0 0.0
      %879 = vmatpush.msra.mxu0 0.0
      %880 = vmatpush.msra.mxu0 0.0
      %881 = vmatpush.msra.mxu0 0.0
      %882 = vmatpush.msra.mxu0 0.0
      %883 = vmatpush.msra.mxu0 0.0
      %884 = vmatpush.msra.mxu0 0.0
      %885 = vmatpush.msra.mxu0 0.0
      %886 = vmatpush.msra.mxu0 0.0
      %887 = vmatpush.msra.mxu0 0.0
      %888 = vmatpush.msra.mxu0 0.0
      %889 = vmatpush.msra.mxu0 0.0
      %890 = vmatpush.msra.mxu0 0.0
      %891 = vmatpush.msra.mxu0 %v854
      %892 = vmatpush.msra.mxu0 %v853
      %893 = vmatmul.f32.gmra.mxu0 %v873
      %v894 = vpop.f32.mrf.mxu0
      %v895 = vadd.f32 0.0, %v894
      %896 = vmatmul.f32.gmra.mxu0 %v875
      %v897 = vpop.f32.mrf.mxu0
      %v898 = vadd.f32 0.0, %v897
      %899 = vdwg.mxu0
      %v900 = vadd.f32 %v844, %v895
      %v901 = vadd.f32 %v845, %v898
      %902 = vst [vmem:[#allocation1] sm:$0xff] %v270
      %s903 = scalar_lea.vmem [#allocation1], 1
      %v904 = vld [vmem:[%s903] ss:$4 sm:$0xff]
      %s905 = scalar_lea.vmem [#allocation1], 2
      %v906 = vld [vmem:[%s905] ss:$4 sm:$0xff]
      %s907 = scalar_lea.vmem [#allocation1], 3
      %v908 = vld [vmem:[%s907] ss:$4 sm:$0xff]
      %909 = vst [vmem:[#allocation1 + $0x20] sm:$0xff] %v267
      %s910 = scalar_lea.vmem [#allocation1], 33
      %v911 = vld [vmem:[%s910] ss:$4 sm:$0xff]
      %s912 = scalar_lea.vmem [#allocation1], 34
      %v913 = vld [vmem:[%s912] ss:$4 sm:$0xff]
      %s914 = scalar_lea.vmem [#allocation1], 35
      %v915 = vld [vmem:[%s914] ss:$4 sm:$0xff]
      %916 = vst [vmem:[#allocation1] sm:$0xff] %v271
      %v917 = vld [vmem:[%s903] ss:$4 sm:$0xff]
      %v918 = vld [vmem:[%s905] ss:$4 sm:$0xff]
      %v919 = vld [vmem:[%s907] ss:$4 sm:$0xff]
      %s920 = scalar_lea.vmem %s3, 128
      %v921 = vld [vmem:[%s920] sm:$0xff]
      %v922 = vld [vmem:[%s920 + $0x8] sm:$0xff]
      %923 = vst [vmem:[#allocation1] ss:$9 sm:$0xff] %v904
      %s924 = scalar_lea.vmem [#allocation1], 1
      %925 = vst [vmem:[%s924] ss:$9 sm:$0xff] %v906
      %s926 = scalar_lea.vmem [#allocation1], 2
      %927 = vst [vmem:[%s926] ss:$9 sm:$0xff] %v908
      %s928 = scalar_lea.vmem [#allocation1], 3
      %929 = vst [vmem:[%s928] ss:$9 sm:$0xff] %v911
      %s930 = scalar_lea.vmem [#allocation1], 4
      %931 = vst [vmem:[%s930] ss:$9 sm:$0xff] %v913
      %s932 = scalar_lea.vmem [#allocation1], 5
      %933 = vst [vmem:[%s932] ss:$9 sm:$0xff] %v915
      %s934 = scalar_lea.vmem [#allocation1], 6
      %935 = vst [vmem:[%s934] ss:$9 sm:$0xff] %v917
      %s936 = scalar_lea.vmem [#allocation1], 7
      %937 = vst [vmem:[%s936] ss:$9 sm:$0xff] %v918
      %v938 = vld [vmem:[#allocation1] sm:$0xff]
      %939 = vst [vmem:[#allocation1] ss:$9 sm:$0xff] %v919
      %v940 = vld [vmem:[#allocation1] sm:$0xff]
      %v941 = vsel %vm445, %v938, 0
      %v943 = vsel %vm445, %v940, 0
      %945 = vmatpush.msra.mxu0 0.0
      %946 = vmatpush.msra.mxu0 0.0
      %947 = vmatpush.msra.mxu0 0.0
      %948 = vmatpush.msra.mxu0 0.0
      %949 = vmatpush.msra.mxu0 0.0
      %950 = vmatpush.msra.mxu0 0.0
      %951 = vmatpush.msra.mxu0 0.0
      %952 = vmatpush.msra.mxu0 0.0
      %953 = vmatpush.msra.mxu0 0.0
      %954 = vmatpush.msra.mxu0 0.0
      %955 = vmatpush.msra.mxu0 0.0
      %956 = vmatpush.msra.mxu0 0.0
      %957 = vmatpush.msra.mxu0 0.0
      %958 = vmatpush.msra.mxu0 0.0
      %959 = vmatpush.msra.mxu0 %v922
      %960 = vmatpush.msra.mxu0 %v921
      %961 = vmatmul.f32.gmra.mxu0 %v941
      %v962 = vpop.f32.mrf.mxu0
      %v963 = vadd.f32 0.0, %v962
      %964 = vmatmul.f32.gmra.mxu0 %v943
      %v965 = vpop.f32.mrf.mxu0
      %v966 = vadd.f32 0.0, %v965
      %967 = vdwg.mxu0
      %v968 = vadd.f32 %v900, %v963
      %v969 = vadd.f32 %v901, %v966
      %v971 = vperm.slane %v226, 0
      %v973 = vadd.f32 %v968, %v971
      %v974 = vadd.f32 %v969, %v971
      %v975 = vmax.f32 %v973, 0.0
      %v976 = vmax.f32 %v974, 0.0
      %v979 = vrot.slane %v975, 1
      %v980 = vrot.slane %v975, 2
      %v981 = vrot.slane %v975, 3
      %v982 = vrot.slane %v975, 4
      %v983 = vrot.slane %v975, 5
      %v984 = vrot.slane %v975, 6
      %v985 = vrot.slane %v975, 7
      %986 = vst [vmem:[#allocation1] ss:$9 sm:$0xff] %v975
      %s987 = scalar_lea.vmem [#allocation1], 1
      %988 = vst [vmem:[%s987] ss:$9 sm:$0xff] %v979
      %s989 = scalar_lea.vmem [#allocation1], 2
      %990 = vst [vmem:[%s989] ss:$9 sm:$0xff] %v980
      %v991 = vld [vmem:[#allocation1] sm:$0xff]
      %992 = vst [vmem:[#allocation1] ss:$9 sm:$0xff] %v981
      %993 = vst [vmem:[%s987] ss:$9 sm:$0xff] %v982
      %994 = vst [vmem:[%s989] ss:$9 sm:$0xff] %v983
      %v995 = vld [vmem:[#allocation1] sm:$0xff]
      %996 = vst [vmem:[#allocation1] ss:$9 sm:$0xff] %v984
      %997 = vst [vmem:[%s987] ss:$9 sm:$0xff] %v985
      %998 = vst [vmem:[%s989] ss:$9 sm:$0xff] %v976
      %v999 = vld [vmem:[#allocation1] sm:$0xff]
      %1003 = vxpose.xlu0.b32.start [1/16] %v991, 128
      %1004 = vxpose.xlu0.b32.cont [2/16] 0.0, 128
      %1005 = vxpose.xlu0.b32.cont [3/16] 0.0, 128
      %1006 = vxpose.xlu0.b32.cont [4/16] 0.0, 128
      %1007 = vxpose.xlu0.b32.cont [5/16] 0.0, 128
      %1008 = vxpose.xlu0.b32.cont [6/16] 0.0, 128
      %1009 = vxpose.xlu0.b32.cont [7/16] 0.0, 128
      %1010 = vxpose.xlu0.b32.cont [8/16] 0.0, 128
      %1011 = vxpose.xlu0.b32.cont [9/16] 0.0, 128
      %1012 = vxpose.xlu0.b32.cont [10/16] 0.0, 128
      %1013 = vxpose.xlu0.b32.cont [11/16] 0.0, 128
      %1014 = vxpose.xlu0.b32.cont [12/16] 0.0, 128
      %1015 = vxpose.xlu0.b32.cont [13/16] 0.0, 128
      %1016 = vxpose.xlu0.b32.cont [14/16] 0.0, 128
      %1017 = vxpose.xlu0.b32.cont [15/16] 0.0, 128
      %1018 = vxpose.xlu0.b32.end [16/16] 0.0, 128
      %v1019 = vpop.trf.xlu0
      %v1020 = vpop.trf.xlu0
      %v1021 = vpop.trf.xlu0
      %v1022 = vpop.trf.xlu0
      %v1023 = vpop.trf.xlu0
      %v1024 = vpop.trf.xlu0
      %v1025 = vpop.trf.xlu0
      %v1026 = vpop.trf.xlu0
      %v1027 = vpop.trf.xlu0
      %v1028 = vpop.trf.xlu0
      %v1029 = vpop.trf.xlu0
      %v1030 = vpop.trf.xlu0
      %v1031 = vpop.trf.xlu0
      %v1032 = vpop.trf.xlu0
      %v1033 = vpop.trf.xlu0
      %v1034 = vpop.trf.xlu0
      %1035 = vxpose.xlu0.b32.start [1/16] %v995, 128
      %1036 = vxpose.xlu0.b32.cont [2/16] 0.0, 128
      %1037 = vxpose.xlu0.b32.cont [3/16] 0.0, 128
      %1038 = vxpose.xlu0.b32.cont [4/16] 0.0, 128
      %1039 = vxpose.xlu0.b32.cont [5/16] 0.0, 128
      %1040 = vxpose.xlu0.b32.cont [6/16] 0.0, 128
      %1041 = vxpose.xlu0.b32.cont [7/16] 0.0, 128
      %1042 = vxpose.xlu0.b32.cont [8/16] 0.0, 128
      %1043 = vxpose.xlu0.b32.cont [9/16] 0.0, 128
      %1044 = vxpose.xlu0.b32.cont [10/16] 0.0, 128
      %1045 = vxpose.xlu0.b32.cont [11/16] 0.0, 128
      %1046 = vxpose.xlu0.b32.cont [12/16] 0.0, 128
      %1047 = vxpose.xlu0.b32.cont [13/16] 0.0, 128
      %1048 = vxpose.xlu0.b32.cont [14/16] 0.0, 128
      %1049 = vxpose.xlu0.b32.cont [15/16] 0.0, 128
      %1050 = vxpose.xlu0.b32.end [16/16] 0.0, 128
      %v1051 = vpop.trf.xlu0
      %v1052 = vpop.trf.xlu0
      %v1053 = vpop.trf.xlu0
      %v1054 = vpop.trf.xlu0
      %v1055 = vpop.trf.xlu0
      %v1056 = vpop.trf.xlu0
      %v1057 = vpop.trf.xlu0
      %v1058 = vpop.trf.xlu0
      %v1059 = vpop.trf.xlu0
      %v1060 = vpop.trf.xlu0
      %v1061 = vpop.trf.xlu0
      %v1062 = vpop.trf.xlu0
      %v1063 = vpop.trf.xlu0
      %v1064 = vpop.trf.xlu0
      %v1065 = vpop.trf.xlu0
      %v1066 = vpop.trf.xlu0
      %1067 = vxpose.xlu0.b32.start [1/16] %v999, 128
      %1068 = vxpose.xlu0.b32.cont [2/16] 0.0, 128
      %1069 = vxpose.xlu0.b32.cont [3/16] 0.0, 128
      %1070 = vxpose.xlu0.b32.cont [4/16] 0.0, 128
      %1071 = vxpose.xlu0.b32.cont [5/16] 0.0, 128
      %1072 = vxpose.xlu0.b32.cont [6/16] 0.0, 128
      %1073 = vxpose.xlu0.b32.cont [7/16] 0.0, 128
      %1074 = vxpose.xlu0.b32.cont [8/16] 0.0, 128
      %1075 = vxpose.xlu0.b32.cont [9/16] 0.0, 128
      %1076 = vxpose.xlu0.b32.cont [10/16] 0.0, 128
      %1077 = vxpose.xlu0.b32.cont [11/16] 0.0, 128
      %1078 = vxpose.xlu0.b32.cont [12/16] 0.0, 128
      %1079 = vxpose.xlu0.b32.cont [13/16] 0.0, 128
      %1080 = vxpose.xlu0.b32.cont [14/16] 0.0, 128
      %1081 = vxpose.xlu0.b32.cont [15/16] 0.0, 128
      %1082 = vxpose.xlu0.b32.end [16/16] 0.0, 128
      %v1083 = vpop.trf.xlu0
      %v1084 = vpop.trf.xlu0
      %v1085 = vpop.trf.xlu0
      %v1086 = vpop.trf.xlu0
      %v1087 = vpop.trf.xlu0
      %v1088 = vpop.trf.xlu0
      %v1089 = vpop.trf.xlu0
      %v1090 = vpop.trf.xlu0
      %v1091 = vpop.trf.xlu0
      %v1092 = vpop.trf.xlu0
      %v1093 = vpop.trf.xlu0
      %v1094 = vpop.trf.xlu0
      %v1095 = vpop.trf.xlu0
      %v1096 = vpop.trf.xlu0
      %v1097 = vpop.trf.xlu0
      %v1098 = vpop.trf.xlu0
      %v1099 = vrot.slane %v1083, 4
      %vm1100 = vcmask 1047556
      %v1101 = vsel %vm1100, %v1099, %v1019
      %v1102 = vrot.slane %v1019, 4
      %v1103 = vsel %vm1100, %v1083, %v1102
      %v1105 = vunpack.c.l.s4 1983009808
      %v1106 = vunpack.c.0.s8 %v1105
      %v1107 = vperm.slane %v1101, %v1106
      %v1109 = vunpack.c.l.s4 1983009808
      %v1110 = vunpack.c.0.s8 %v1109
      %v1111 = vperm.slane %v1103, %v1110
      %v1112 = vrot.slane %v1051, 4
      %v1113 = vsel %vm1100, 0.0, %v1112
      %v1115 = vunpack.c.l.s4 1983009808
      %v1116 = vunpack.c.0.s8 %v1115
      %v1117 = vperm.slane %v1051, %v1116
      %v1119 = vunpack.c.l.s4 1983009808
      %v1120 = vunpack.c.0.s8 %v1119
      %v1121 = vperm.slane %v1113, %v1120
      %v1122 = vrot.slane %v1117, 4
      %v1123 = vsel %vm1100, %v1122, %v1107
      %v1124 = vrot.slane %v1107, 4
      %v1125 = vsel %vm1100, %v1117, %v1124
      %v1127 = vunpack.c.l.s4 1934713408
      %v1128 = vunpack.c.0.s8 %v1127
      %v1129 = vperm.slane %v1123, %v1128
      %v1131 = vunpack.c.l.s4 1934713408
      %v1132 = vunpack.c.0.s8 %v1131
      %v1133 = vperm.slane %v1125, %v1132
      %v1134 = vrot.slane %v1121, 4
      %v1135 = vsel %vm1100, %v1134, %v1111
      %v1136 = vrot.slane %v1111, 4
      %v1137 = vsel %vm1100, %v1121, %v1136
      %v1139 = vunpack.c.l.s4 1934713408
      %v1140 = vunpack.c.0.s8 %v1139
      %v1141 = vperm.slane %v1135, %v1140
      %v1143 = vunpack.c.l.s4 1934713408
      %v1144 = vunpack.c.0.s8 %v1143
      %v1145 = vperm.slane %v1137, %v1144
      %v1146 = vrot.slane %v1129, 4
      %v1147 = vsel %vm1100, 0.0, %v1146
      %v1148 = vrot.slane %v1133, 4
      %v1149 = vsel %vm1100, 0.0, %v1148
      %v1150 = vrot.slane %v1141, 4
      %v1151 = vsel %vm1100, 0.0, %v1150
      %v1152 = vrot.slane %v1145, 4
      %v1153 = vsel %vm1100, 0.0, %v1152
      %v1154 = vrot.slane %v1084, 4
      %v1155 = vsel %vm1100, %v1154, %v1020
      %v1156 = vrot.slane %v1020, 4
      %v1157 = vsel %vm1100, %v1084, %v1156
      %v1159 = vunpack.c.l.s4 1983009808
      %v1160 = vunpack.c.0.s8 %v1159
      %v1161 = vperm.slane %v1155, %v1160
      %v1163 = vunpack.c.l.s4 1983009808
      %v1164 = vunpack.c.0.s8 %v1163
      %v1165 = vperm.slane %v1157, %v1164
      %v1166 = vrot.slane %v1052, 4
      %v1167 = vsel %vm1100, 0.0, %v1166
      %v1169 = vunpack.c.l.s4 1983009808
      %v1170 = vunpack.c.0.s8 %v1169
      %v1171 = vperm.slane %v1052, %v1170
      %v1173 = vunpack.c.l.s4 1983009808
      %v1174 = vunpack.c.0.s8 %v1173
      %v1175 = vperm.slane %v1167, %v1174
      %v1176 = vrot.slane %v1171, 4
      %v1177 = vsel %vm1100, %v1176, %v1161
      %v1178 = vrot.slane %v1161, 4
      %v1179 = vsel %vm1100, %v1171, %v1178
      %v1181 = vunpack.c.l.s4 1934713408
      %v1182 = vunpack.c.0.s8 %v1181
      %v1183 = vperm.slane %v1177, %v1182
      %v1185 = vunpack.c.l.s4 1934713408
      %v1186 = vunpack.c.0.s8 %v1185
      %v1187 = vperm.slane %v1179, %v1186
      %v1188 = vrot.slane %v1175, 4
      %v1189 = vsel %vm1100, %v1188, %v1165
      %v1190 = vrot.slane %v1165, 4
      %v1191 = vsel %vm1100, %v1175, %v1190
      %v1193 = vunpack.c.l.s4 1934713408
      %v1194 = vunpack.c.0.s8 %v1193
      %v1195 = vperm.slane %v1189, %v1194
      %v1197 = vunpack.c.l.s4 1934713408
      %v1198 = vunpack.c.0.s8 %v1197
      %v1199 = vperm.slane %v1191, %v1198
      %v1200 = vrot.slane %v1183, 4
      %v1201 = vsel %vm1100, 0.0, %v1200
      %v1202 = vrot.slane %v1187, 4
      %v1203 = vsel %vm1100, 0.0, %v1202
      %v1204 = vrot.slane %v1195, 4
      %v1205 = vsel %vm1100, 0.0, %v1204
      %v1206 = vrot.slane %v1199, 4
      %v1207 = vsel %vm1100, 0.0, %v1206
      %1209 = vrot.lane.b32.xlu0 %v1147, 3
      %v1210 = vpop.permute.xlu0 %1209
      %1213 = vrot.lane.b32.xlu0 %v1133, 6
      %v1214 = vpop.permute.xlu0 %1213
      %1217 = vrot.lane.b32.xlu0 %v1149, 9
      %v1218 = vpop.permute.xlu0 %1217
      %1221 = vrot.lane.b32.xlu0 %v1141, 12
      %v1222 = vpop.permute.xlu0 %1221
      %1225 = vrot.lane.b32.xlu0 %v1151, 15
      %v1226 = vpop.permute.xlu0 %1225
      %1229 = vrot.lane.b32.xlu0 %v1145, 18
      %v1230 = vpop.permute.xlu0 %1229
      %1233 = vrot.lane.b32.xlu0 %v1153, 21
      %v1234 = vpop.permute.xlu0 %1233
      %1237 = vrot.lane.b32.xlu0 %v1183, 24
      %v1238 = vpop.permute.xlu0 %1237
      %1241 = vrot.lane.b32.xlu0 %v1201, 27
      %v1242 = vpop.permute.xlu0 %1241
      %1245 = vrot.lane.b32.xlu0 %v1187, 30
      %v1246 = vpop.permute.xlu0 %1245
      %1249 = vrot.lane.b32.xlu0 %v1203, 33
      %v1250 = vpop.permute.xlu0 %1249
      %1253 = vrot.lane.b32.xlu0 %v1195, 36
      %v1254 = vpop.permute.xlu0 %1253
      %1257 = vrot.lane.b32.xlu0 %v1205, 39
      %v1258 = vpop.permute.xlu0 %1257
      %1261 = vrot.lane.b32.xlu0 %v1199, 42
      %v1262 = vpop.permute.xlu0 %1261
      %1265 = vrot.lane.b32.xlu0 %v1207, 45
      %v1266 = vpop.permute.xlu0 %1265
      %vm1268 = vcmask 23552
      %v1269 = vsel %vm1268, %v1129, %v1210
      %vm1270 = vcmask 48128
      %v1271 = vsel %vm1270, %v1269, %v1214
      %v1272 = vsel %vm232, %v1271, %v1218
      %vm1273 = vcmask 97280
      %v1274 = vsel %vm1273, %v1272, %v1222
      %vm1275 = vcmask 121856
      %v1276 = vsel %vm1275, %v1274, %v1226
      %vm1277 = vcmask 146432
      %v1278 = vsel %vm1277, %v1276, %v1230
      %vm1279 = vcmask 171008
      %v1280 = vsel %vm1279, %v1278, %v1234
      %vm1281 = vcmask 195584
      %v1282 = vsel %vm1281, %v1280, %v1238
      %vm1283 = vcmask 220160
      %v1284 = vsel %vm1283, %v1282, %v1242
      %vm1285 = vcmask 244736
      %v1286 = vsel %vm1285, %v1284, %v1246
      %vm1287 = vcmask 269312
      %v1288 = vsel %vm1287, %v1286, %v1250
      %vm1289 = vcmask 293888
      %v1290 = vsel %vm1289, %v1288, %v1254
      %vm1291 = vcmask 318464
      %v1292 = vsel %vm1291, %v1290, %v1258
      %vm1293 = vcmask 343040
      %v1294 = vsel %vm1293, %v1292, %v1262
      %vm1295 = vcmask 367616
      %v1296 = vsel %vm1295, %v1294, %v1266
      %vm1297 = vcmask 387072
      %1298 = vst.msk [vmem:[%s222] sm:$0x7] %vm1297, %v1296
      %p1299 = scmp.lt.s32.totalorder %s16, 1
      %s1300 = scalar_select %p1299, %s16, 1
      %s1301 = smul.addr %s1300, 4
      %s1302 = scalar_lea.vmem %s5, %s1301
      // Predicated region
      $region41: #{conv2d_subsampling_forward.1} parent=39 // pred_check
        %p1303 = pneg %p144
      $region42: #{conv2d_subsampling_forward.1} parent=39 // pred_check_branch
        %1305 = sbr.rel (%p1303) target = $region44
      $region43: #{conv2d_subsampling_forward.1} parent=39 // pred_region
        _
      $region44: #{conv2d_subsampling_forward.1} parent=39 // pred_fallthru
        _
    $region40: #{conv2d_subsampling_forward.1} parent=5 // pred_fallthru
      _
    %p1306 = scmp.le.s32.totalorder 2, %s11
    // Predicated region
    $region45: #{conv2d_subsampling_forward.1} parent=5 // pred_check
      %p1307 = pneg %p1306
    $region46: #{conv2d_subsampling_forward.1} parent=5 // pred_check_branch
      %1309 = sbr.rel (%p1307) target = $region48
    $region47: #{conv2d_subsampling_forward.1} parent=5 // pred_region
      %s1310 = ssub.s32 %s11, 2
      // Predicated region
      $region49: #{conv2d_subsampling_forward.1} parent=47 // pred_check
        %p1311 = pneg %p150
      $region50: #{conv2d_subsampling_forward.1} parent=47 // pred_check_branch
        %1313 = sbr.rel (%p1311) target = $region52
      $region51: #{conv2d_subsampling_forward.1} parent=47 // pred_region
        %p1314 = scmp.lt.s32.totalorder %s17, 1
        %s1315 = scalar_select %p1314, %s17, 1
        %s1316 = smul.addr %s1315, 4
        %s1317 = scalar_lea.vmem %s5, %s1316
      $region52: #{conv2d_subsampling_forward.1} parent=47 // pred_fallthru
        _
    $region48: #{conv2d_subsampling_forward.1} parent=5 // pred_fallthru
      _
  $region6: #{conv2d_subsampling_forward.1} parent=0 // loop_footer
    %s15 = sadd.s32 1, %s11
  $region7: #{conv2d_subsampling_forward.1} parent=0 // loop_footer_branch
    %10 = sbr.rel target = $region3
  $region8: #{conv2d_subsampling_forward.1} parent=0 // loop_exit
    _

</llo_original>
